<compile_context>
chip_gen: v5e
topology: v5e:2x2
jax: 0.10.0
libtpu: 0.0.40
codegen_flags: <defaults>
</compile_context>

<pallas_src>
import functools

import jax
import jax.numpy as jnp
from jax.experimental import pallas as pl
from jax.experimental.pallas import tpu as pltpu


def _stable_sigmoid(z):
    """Numerically stable logistic: never exponentiates a positive number."""
    ez = jnp.exp(-jnp.abs(z))
    pos = 1.0 / (1.0 + ez)
    return jnp.where(z >= 0, pos, 1.0 - pos)


def _decoder_kernel(ids_ref,                       # SMEM (B,) int32 (scalar prefetch)
                    emb_ref,                       # VMEM (V,E) f32  or  ANY/HBM (V,E)
                    h_ref, c_ref, ctx_ref,         # VMEM (B, 2U) each, f32
                    wxh_ref, bg_ref,               # (E+2U, 8U) cdt, (1, 8U) f32
                    w1d_ref, w1c_ref, b1_ref,      # (2U, U) cdt x2, (1, U) f32
                    w2_ref, b2_ref,                # (U, TV) cdt, (1, TV) f32
                    *rest, B, U, E, pointer, emb_in_vmem):
    i = 0
    if pointer:
        wgc_ref, wgd_ref, wge_ref, bgen_ref = rest[i:i + 4]
        i += 4
    pvocab_ref, misc_ref = rest[i:i + 2]
    i += 2
    ff1_scr, m_scr, l_scr = rest[i:i + 3]
    i += 3
    if not emb_in_vmem:
        emb_buf, dma_sem = rest[i:i + 2]

    H2 = 2 * U
    p_pass = pl.program_id(0)        # 0: softmax statistics pass, 1: write pass
    v_idx = pl.program_id(1)         # vocab tile index
    cdt = w2_ref.dtype               # MXU operand dtype (bf16 or f32)

    # ------------------------------------------------------------------
    # (0, 0): embedding gather + bidirectional LSTM step + FF1 + pointer
    # gate.  Runs exactly once; V-independent results live in scratch.
    # ------------------------------------------------------------------
    @pl.when((p_pass == 0) & (v_idx == 0))
    def _():
        h_cat = h_ref[...]                        # (B, 2U) = [h_fwd | h_bwd]
        c_cat = c_ref[...]
        ctx = ctx_ref[...]
        wxh = wxh_ref[...]                        # rows [0:E]=W_ih, [E:]=W_hh

        if emb_in_vmem:
            # Small frozen table: whole table is VMEM-resident; gather rows
            # with dynamic sublane slices and do ONE fused gate matmul on
            # [x_emb | h_cat].
            rows = [emb_ref[pl.ds(ids_ref[b], 1), :] for b in range(B)]
            x_emb = jnp.concatenate(rows, axis=0)             # (B, E) f32
            xh = jnp.concatenate([x_emb, h_cat], axis=1)      # (B, E + 2U)
            gates = (jnp.dot(xh.astype(cdt), wxh,
                             preferred_element_type=jnp.float32)
                     + bg_ref[...])                           # (B, 8U)
        else:
            # Large table: DMA-gather the B rows from HBM and hide the
            # latency behind the h-recurrence half of the gate matmul.
            copies = [pltpu.make_async_copy(emb_ref.at[ids_ref[b]],
                                            emb_buf.at[b], dma_sem.at[b])
                      for b in range(B)]
            for cp in copies:
                cp.start()
            gates = (jnp.dot(h_cat.astype(cdt), wxh[E:, :],
                             preferred_element_type=jnp.float32)
                     + bg_ref[...])
            for cp in copies:
                cp.wait()
            x_emb = emb_buf[...]
            gates = gates + jnp.dot(x_emb.astype(cdt), wxh[:E, :],
                                    preferred_element_type=jnp.float32)

        # Gate columns pre-ordered [i | f | g | o] x [fwd, bwd]: every
        # nonlinearity acts on a contiguous (B, 2U) slab aligned with h/c.
        i_g = _stable_sigmoid(gates[:, 0 * H2:1 * H2])
        f_g = _stable_sigmoid(gates[:, 1 * H2:2 * H2])
        g_g = jnp.tanh(gates[:, 2 * H2:3 * H2])
        o_g = _stable_sigmoid(gates[:, 3 * H2:4 * H2])
        c_new = f_g * c_cat + i_g * g_g                       # (B, 2U)
        h_new = o_g * jnp.tanh(c_new)                         # decoder_output

        # FF1 on [decoder_output ; context] without materializing the concat.
        ff1_scr[...] = (jnp.dot(h_new.astype(cdt), w1d_ref[...],
                                preferred_element_type=jnp.float32)
                        + jnp.dot(ctx.astype(cdt), w1c_ref[...],
                                  preferred_element_type=jnp.float32)
                        + b1_ref[...])                        # (B, U)

        # Online-softmax state.
        m_scr[...] = jnp.full_like(m_scr, -jnp.inf)
        l_scr[...] = jnp.zeros_like(l_scr)

        # Pack narrow outputs (h, c, p_gen) into one lane-padded slab so the
        # HBM writeback is a single dense DMA instead of three tiny ones.
        misc_ref[...] = jnp.zeros_like(misc_ref)
        misc_ref[:, 0:H2] = h_new
        misc_ref[:, H2:2 * H2] = c_new
        if pointer:
            # Pointer gate: VPU broadcast-mul + lane reduce (no N=1 matmul).
            pgen_logit = (jnp.sum(ctx * wgc_ref[...], axis=-1, keepdims=True)
                          + jnp.sum(h_new * wgd_ref[...], axis=-1, keepdims=True)
                          + jnp.sum(x_emb * wge_ref[...], axis=-1, keepdims=True)
                          + bgen_ref[...])
            misc_ref[:, 2 * H2:2 * H2 + 1] = _stable_sigmoid(pgen_logit)

    # ------------------------------------------------------------------
    # Every iteration: one (B, TILE_V) slab of FF2 logits.  The W2 tile is
    # streamed HBM->VMEM and double-buffered by the pipeline.
    # ------------------------------------------------------------------
    logits = (jnp.dot(ff1_scr[...].astype(cdt), w2_ref[...],
                      preferred_element_type=jnp.float32)
              + b2_ref[...])                                  # (B, TILE_V) f32

    # Pass 0: accumulate running max / running sum (flash-style online).
    @pl.when(p_pass == 0)
    def _():
        m_prev = m_scr[...]
        m_new = jnp.maximum(m_prev, jnp.max(logits, axis=-1, keepdims=True))
        e = jnp.exp(logits - m_new)
        l_scr[...] = (l_scr[...] * jnp.exp(m_prev - m_new)
                      + jnp.sum(e, axis=-1, keepdims=True))
        m_scr[...] = m_new
        pvocab_ref[...] = e          # placeholder; overwritten in pass 1

    # First pass-1 iteration: one reciprocal per row for the whole vocab.
    @pl.when((p_pass == 1) & (v_idx == 0))
    def _():
        l_scr[...] = pl.reciprocal(l_scr[...], approx=True)

    # Pass 1: normalized, lane-dense softmax tiles.
    @pl.when(p_pass == 1)
    def _():
        pvocab_ref[...] = jnp.exp(logits - m_scr[...]) * l_scr[...]


def prepare_decoder_params(raw, dec_units, param_dtype=jnp.bfloat16):
    """One-time (model-load) conversion of PyTorch-layout weights into the
    fused-kernel layout.  Do NOT call this per decode step."""
    U = dec_units

    def gate_cols(wt_f, wt_b):                    # (in, 4U) each -> (in, 8U)
        cols = []
        for gi in range(4):
            cols.append(wt_f[:, gi * U:(gi + 1) * U])
            cols.append(wt_b[:, gi * U:(gi + 1) * U])
        return jnp.concatenate(cols, axis=1)

    wih = gate_cols(raw["w_ih_f"].T, raw["w_ih_b"].T)          # (E, 8U)
    E = wih.shape[0]

    whh = jnp.zeros((2 * U, 8 * U), jnp.float32)               # block structured
    wtf, wtb = raw["w_hh_f"].T, raw["w_hh_b"].T                # (U, 4U)
    for gi in range(4):
        whh = whh.at[:U, (2 * gi) * U:(2 * gi + 1) * U].set(wtf[:, gi * U:(gi + 1) * U])
        whh = whh.at[U:, (2 * gi + 1) * U:(2 * gi + 2) * U].set(wtb[:, gi * U:(gi + 1) * U])

    bf = raw["b_ih_f"] + raw["b_hh_f"]
    bb = raw["b_ih_b"] + raw["b_hh_b"]
    segs = []
    for gi in range(4):
        segs.append(bf[gi * U:(gi + 1) * U])
        segs.append(bb[gi * U:(gi + 1) * U])
    bg = jnp.concatenate(segs)[None, :]                        # (1, 8U)

    w1t = raw["w1_w"].T                                        # (4U, U)
    prep = {
        "embedding": raw["embedding"].astype(jnp.float32),     # (V, E)
        "wxh": jnp.concatenate([wih, whh], axis=0).astype(param_dtype),  # (E+2U, 8U)
        "bg": bg.astype(jnp.float32),
        "w1d": w1t[:2 * U].astype(param_dtype),
        "w1c": w1t[2 * U:].astype(param_dtype),
        "b1": raw["w1_b"][None, :].astype(jnp.float32),
        "w2": raw["w2_w"].T.astype(param_dtype),               # (U, V)
        "b2": raw["w2_b"][None, :].astype(jnp.float32),
    }
    if "wgen_w" in raw:
        wg = raw["wgen_w"][0].astype(jnp.float32)              # (4U + E,)
        prep["wg_ctx"] = wg[:2 * U][None, :]
        prep["wg_dec"] = wg[2 * U:4 * U][None, :]
        prep["wg_emb"] = wg[4 * U:][None, :]
        prep["bgen"] = raw["wgen_b"].reshape(1, 1).astype(jnp.float32)
    return prep


def _pick_tile_v(U, V, itemsize, max_tile_bytes=2 << 20):
    """Largest 128-multiple divisor of V whose W2 tile fits the VMEM budget
    (sized so 2x buffers stay well inside v7x's 64 MiB)."""
    if V <= 128 or V % 128 != 0:
        return V
    best = 128
    t = 128
    while t <= V:
        if V % t == 0 and U * t * itemsize <= max_tile_bytes:
            best = t
        t += 128
    return best


def _decoder_forward_impl(params, x_ids, dec_states, context_vector, *,
                          pointer=True, emb_in_vmem=None, tile_v=None):
    """Pallas implementation of Decoder.forward.

    x_ids: (B, 1) int token ids; dec_states: (h, c), each (2, B, U);
    context_vector: (B, 2U).  Returns (p_vocab, (h, c), p_gen)."""
    H2, U = params["w1d"].shape
    E = params["wxh"].shape[0] - H2
    V = params["w2"].shape[1]
    h0, c0 = dec_states
    B = h0.shape[1]
    emb = params["embedding"]
    cdt = params["w2"].dtype
    itemsize = jnp.dtype(cdt).itemsize

    if emb_in_vmem is None:
        emb_in_vmem = emb.size * emb.dtype.itemsize <= (4 << 20)
    if tile_v is None:
        tile_v = _pick_tile_v(U, V, itemsize)
    assert V % tile_v == 0
    nv = V // tile_v

    ids = x_ids.reshape(B).astype(jnp.int32)
    h_cat = jnp.transpose(h0, (1, 0, 2)).reshape(B, H2).astype(jnp.float32)
    c_cat = jnp.transpose(c0, (1, 0, 2)).reshape(B, H2).astype(jnp.float32)
    ctx = context_vector.astype(jnp.float32)

    const2d = lambda pp, vv, ids_ref: (0, 0)

    in_specs = [
        (pl.BlockSpec((V, E), const2d) if emb_in_vmem
         else pl.BlockSpec(memory_space=pl.ANY)),              # embedding table
        pl.BlockSpec((B, H2), const2d),                        # h
        pl.BlockSpec((B, H2), const2d),                        # c
        pl.BlockSpec((B, H2), const2d),                        # context
        pl.BlockSpec((E + H2, 8 * U), const2d),                # fused [W_ih; W_hh]
        pl.BlockSpec((1, 8 * U), const2d),                     # gate bias
        pl.BlockSpec((H2, U), const2d),                        # W1 (decoder rows)
        pl.BlockSpec((H2, U), const2d),                        # W1 (context rows)
        pl.BlockSpec((1, U), const2d),                         # b1
        pl.BlockSpec((U, tile_v), lambda pp, vv, ids_ref: (0, vv)),   # W2 tile
        pl.BlockSpec((1, tile_v), lambda pp, vv, ids_ref: (0, vv)),   # b2 tile
    ]
    inputs = [emb, h_cat, c_cat, ctx, params["wxh"], params["bg"],
              params["w1d"], params["w1c"], params["b1"],
              params["w2"], params["b2"]]
    if pointer:
        in_specs += [pl.BlockSpec((1, H2), const2d),
                     pl.BlockSpec((1, H2), const2d),
                     pl.BlockSpec((1, E), const2d),
                     pl.BlockSpec((1, 1), const2d)]
        inputs += [params["wg_ctx"], params["wg_dec"],
                   params["wg_emb"], params["bgen"]]

    misc_w = 2 * H2 + (1 if pointer else 0)
    misc_pad = ((max(misc_w, 128) + 127) // 128) * 128

    out_shape = (jax.ShapeDtypeStruct((B, V), jnp.float32),      # p_vocab
                 jax.ShapeDtypeStruct((B, misc_pad), jnp.float32))  # packed h|c|p_gen
    out_specs = (pl.BlockSpec((B, tile_v), lambda pp, vv, ids_ref: (0, vv)),
                 pl.BlockSpec((B, misc_pad), const2d))

    scratch = [pltpu.VMEM((B, U), jnp.float32),                  # FF1
               pltpu.VMEM((B, 1), jnp.float32),                  # running max
               pltpu.VMEM((B, 1), jnp.float32)]                  # running sum / 1/sum
    if not emb_in_vmem:
        scratch += [pltpu.VMEM((B, E), jnp.float32),             # gathered rows
                    pltpu.SemaphoreType.DMA((B,))]

    # Rough VMEM budget so the request is explicit (and v7x-safe).
    est = (2 * (U + 1) * tile_v * 4
           + 2 * B * (tile_v + misc_pad) * 4
           + 2 * (params["wxh"].size + params["w1d"].size + params["w1c"].size) * itemsize
           + (emb.size * 4 if emb_in_vmem else B * E * 4)
           + 8 * B * max(H2, U) * 4)
    vmem_limit_bytes = int(min(max(2 * est + (4 << 20), 32 << 20), 48 << 20))

    kernel = functools.partial(_decoder_kernel, B=B, U=U, E=E,
                               pointer=pointer, emb_in_vmem=emb_in_vmem)

    grid_spec = pltpu.PrefetchScalarGridSpec(
        num_scalar_prefetch=1,                 # token ids -> SMEM
        grid=(2, nv),                          # (softmax pass, vocab tile)
        in_specs=in_specs,
        out_specs=out_specs,
        scratch_shapes=scratch)

    p_vocab, misc = pl.pallas_call(
        kernel,
        out_shape=out_shape,
        grid_spec=grid_spec,
        compiler_params=pltpu.CompilerParams(
            dimension_semantics=("arbitrary", "arbitrary"),
            vmem_limit_bytes=vmem_limit_bytes),
    )(ids, *inputs)

    h_new = misc[:, :H2].reshape(B, 2, U).transpose(1, 0, 2)     # (2, B, U)
    c_new = misc[:, H2:2 * H2].reshape(B, 2, U).transpose(1, 0, 2)
    p_gen = misc[:, 2 * H2:2 * H2 + 1] if pointer else None
    return p_vocab, (h_new, c_new), p_gen


decoder_forward = jax.jit(_decoder_forward_impl,
                          static_argnames=("pointer", "emb_in_vmem", "tile_v"))


def _reference(raw, x_ids, dec_states, context, pointer=True):
    """Pure-JAX mirror of the PyTorch Decoder.forward."""
    h0, c0 = dec_states
    x_emb = raw["embedding"][x_ids[:, 0]]                      # (B, E)

    def lstm_dir(w_ih, w_hh, b_ih, b_hh, h, c):
        gates = x_emb @ w_ih.T + b_ih + h @ w_hh.T + b_hh
        i, f, g, o = jnp.split(gates, 4, axis=-1)
        i, f, o = jax.nn.sigmoid(i), jax.nn.sigmoid(f), jax.nn.sigmoid(o)
        g = jnp.tanh(g)
        c_new = f * c + i * g
        return o * jnp.tanh(c_new), c_new

    hf, cf = lstm_dir(raw["w_ih_f"], raw["w_hh_f"], raw["b_ih_f"], raw["b_hh_f"], h0[0], c0[0])
    hb, cb = lstm_dir(raw["w_ih_b"], raw["w_hh_b"], raw["b_ih_b"], raw["b_hh_b"], h0[1], c0[1])
    dec_out = jnp.concatenate([hf, hb], axis=-1)               # (B, 2U)
    concat_vec = jnp.concatenate([dec_out, context], axis=-1)
    ff1 = concat_vec @ raw["w1_w"].T + raw["w1_b"]
    ff2 = ff1 @ raw["w2_w"].T + raw["w2_b"]
    p_vocab = jax.nn.softmax(ff2, axis=1)
    h_new = jnp.stack([hf, hb], axis=0)
    c_new = jnp.stack([cf, cb], axis=0)
    p_gen = None
    if pointer:
        x_gen = jnp.concatenate([context, dec_out, x_emb], axis=-1)
        p_gen = jax.nn.sigmoid(x_gen @ raw["wgen_w"].T + raw["wgen_b"])
    return p_vocab, (h_new, c_new), p_gen


if __name__ == "__main__":
    jax.config.update("jax_default_matmul_precision", "highest")

    B, U, E, V = 2, 16, 32, 512        # batch, dec_units, embedding_dim, vocab
    key = jax.random.PRNGKey(0)
    ks = jax.random.split(key, 20)

    raw = {
        "embedding": jax.random.normal(ks[0], (V, E), jnp.float32),
        "w_ih_f": 0.1 * jax.random.normal(ks[1], (4 * U, E), jnp.float32),
        "w_hh_f": 0.1 * jax.random.normal(ks[2], (4 * U, U), jnp.float32),
        "b_ih_f": 0.1 * jax.random.normal(ks[3], (4 * U,), jnp.float32),
        "b_hh_f": 0.1 * jax.random.normal(ks[4], (4 * U,), jnp.float32),
        "w_ih_b": 0.1 * jax.random.normal(ks[5], (4 * U, E), jnp.float32),
        "w_hh_b": 0.1 * jax.random.normal(ks[6], (4 * U, U), jnp.float32),
        "b_ih_b": 0.1 * jax.random.normal(ks[7], (4 * U,), jnp.float32),
        "b_hh_b": 0.1 * jax.random.normal(ks[8], (4 * U,), jnp.float32),
        "w1_w": 0.1 * jax.random.normal(ks[9], (U, 4 * U), jnp.float32),
        "w1_b": 0.1 * jax.random.normal(ks[10], (U,), jnp.float32),
        "w2_w": 0.1 * jax.random.normal(ks[11], (V, U), jnp.float32),
        "w2_b": 0.1 * jax.random.normal(ks[12], (V,), jnp.float32),
        "wgen_w": 0.1 * jax.random.normal(ks[13], (1, 4 * U + E), jnp.float32),
        "wgen_b": 0.1 * jax.random.normal(ks[14], (1,), jnp.float32),
    }

    x_ids = jax.random.randint(ks[15], (B, 1), 0, V, dtype=jnp.int32)
    h0 = jax.random.normal(ks[16], (2, B, U), jnp.float32)
    c0 = jax.random.normal(ks[17], (2, B, U), jnp.float32)
    context = jax.random.normal(ks[18], (B, 2 * U), jnp.float32)

    ref_pv, (ref_h, ref_c), ref_pg = _reference(raw, x_ids, (h0, c0), context, pointer=True)

    # One-time weight preparation (hoisted out of the step path).
    params_f32 = prepare_decoder_params(raw, U, param_dtype=jnp.float32)
    params_bf16 = prepare_decoder_params(raw, U)   # default bf16 MXU operands

    # --- f32 path, multi-tile vocab (exercises the online softmax), VMEM table
    pv, (hn, cn), pg = decoder_forward(params_f32, x_ids, (h0, c0), context,
                                       pointer=True, tile_v=128)
    jax.block_until_ready((pv, hn, cn, pg))
    assert jnp.allclose(pv, ref_pv, rtol=2e-2, atol=1e-5), "p_vocab mismatch"
    assert jnp.allclose(jnp.sum(pv, axis=-1), 1.0, atol=2e-2), "softmax not normalized"
    assert jnp.allclose(hn, ref_h, rtol=1e-4, atol=1e-4), "h state mismatch"
    assert jnp.allclose(cn, ref_c, rtol=1e-4, atol=1e-4), "c state mismatch"
    assert jnp.allclose(pg, ref_pg, rtol=1e-4, atol=1e-4), "p_gen mismatch"

    # --- f32 path, large-table branch (HBM DMA gather overlapped with MXU work)
    pv2, (h2, c2), pg2 = decoder_forward(params_f32, x_ids, (h0, c0), context,
                                         pointer=True, emb_in_vmem=False, tile_v=128)
    jax.block_until_ready((pv2, h2, c2, pg2))
    assert jnp.allclose(pv2, ref_pv, rtol=2e-2, atol=1e-5)
    assert jnp.allclose(h2, ref_h, rtol=1e-4, atol=1e-4)
    assert jnp.allclose(c2, ref_c, rtol=1e-4, atol=1e-4)
    assert jnp.allclose(pg2, ref_pg, rtol=1e-4, atol=1e-4)

    # --- pointer=False specialization (no w_gen inputs, no p_gen output)
    pv3, (h3, c3), pg3 = decoder_forward(params_f32, x_ids, (h0, c0), context,
                                         pointer=False, tile_v=256)
    jax.block_until_ready((pv3, h3, c3))
    assert pg3 is None
    assert jnp.allclose(pv3, ref_pv, rtol=2e-2, atol=1e-5)
    assert jnp.allclose(h3, ref_h, rtol=1e-4, atol=1e-4)
    assert jnp.allclose(c3, ref_c, rtol=1e-4, atol=1e-4)

    # --- production configuration: bf16 MXU operands, auto tile / auto table path
    pv4, (h4, c4), pg4 = decoder_forward(params_bf16, x_ids, (h0, c0), context,
                                         pointer=True)
    jax.block_until_ready((pv4, h4, c4, pg4))
    assert jnp.allclose(pv4, ref_pv, rtol=1e-1, atol=1e-4), "bf16 p_vocab off"
    assert jnp.allclose(h4, ref_h, atol=5e-2), "bf16 h off"
    assert jnp.allclose(c4, ref_c, atol=5e-2), "bf16 c off"
    assert jnp.allclose(pg4, ref_pg, atol=5e-2), "bf16 p_gen off"

    print("KERNEL_OK")
</pallas_src>

<mosaic_0001>
module attributes {stable_mosaic.version = 11 : i64} {
  func.func @_decoder_kernel(%arg0: i32, %arg1: i32, %arg2: memref<2xi32, #tpu.memory_space<smem>>, %arg3: memref<512x32xf32, #tpu.memory_space<vmem>>, %arg4: memref<2x32xf32, #tpu.memory_space<vmem>>, %arg5: memref<2x32xf32, #tpu.memory_space<vmem>>, %arg6: memref<2x32xf32, #tpu.memory_space<vmem>>, %arg7: memref<64x128xf32, #tpu.memory_space<vmem>>, %arg8: memref<1x128xf32, #tpu.memory_space<vmem>>, %arg9: memref<32x16xf32, #tpu.memory_space<vmem>>, %arg10: memref<32x16xf32, #tpu.memory_space<vmem>>, %arg11: memref<1x16xf32, #tpu.memory_space<vmem>>, %arg12: memref<16x128xf32, #tpu.memory_space<vmem>>, %arg13: memref<1x128xf32, #tpu.memory_space<vmem>>, %arg14: memref<1x32xf32, #tpu.memory_space<vmem>>, %arg15: memref<1x32xf32, #tpu.memory_space<vmem>>, %arg16: memref<1x32xf32, #tpu.memory_space<vmem>>, %arg17: memref<1x1xf32, #tpu.memory_space<vmem>>, %arg18: memref<2x128xf32, #tpu.memory_space<vmem>>, %arg19: memref<2x128xf32, #tpu.memory_space<vmem>>, %arg20: memref<2x16xf32, #tpu.memory_space<vmem>>, %arg21: memref<2x1xf32, #tpu.memory_space<vmem>>, %arg22: memref<2x1xf32, #tpu.memory_space<vmem>>) attributes {dimension_semantics = [#tpu.dimension_semantics<arbitrary>, #tpu.dimension_semantics<arbitrary>], iteration_bounds = array<i64: 2, 4>, scalar_prefetch = 1 : i64, scratch_operands = 3 : i64, tpu.core_type = #tpu.core_type<tc>, window_params = [{pipeline_mode = #tpu.pipeline_mode<synchronous>, transform_indices = @transform_0, window_bounds = array<i64: 512, 32>}, {pipeline_mode = #tpu.pipeline_mode<synchronous>, transform_indices = @transform_1, window_bounds = array<i64: 2, 32>}, {pipeline_mode = #tpu.pipeline_mode<synchronous>, transform_indices = @transform_2, window_bounds = array<i64: 2, 32>}, {pipeline_mode = #tpu.pipeline_mode<synchronous>, transform_indices = @transform_3, window_bounds = array<i64: 2, 32>}, {pipeline_mode = #tpu.pipeline_mode<synchronous>, transform_indices = @transform_4, window_bounds = array<i64: 64, 128>}, {pipeline_mode = #tpu.pipeline_mode<synchronous>, transform_indices = @transform_5, window_bounds = array<i64: 1, 128>}, {pipeline_mode = #tpu.pipeline_mode<synchronous>, transform_indices = @transform_6, window_bounds = array<i64: 32, 16>}, {pipeline_mode = #tpu.pipeline_mode<synchronous>, transform_indices = @transform_7, window_bounds = array<i64: 32, 16>}, {pipeline_mode = #tpu.pipeline_mode<synchronous>, transform_indices = @transform_8, window_bounds = array<i64: 1, 16>}, {transform_indices = @transform_9, window_bounds = array<i64: 16, 128>}, {transform_indices = @transform_10, window_bounds = array<i64: 1, 128>}, {pipeline_mode = #tpu.pipeline_mode<synchronous>, transform_indices = @transform_11, window_bounds = array<i64: 1, 32>}, {pipeline_mode = #tpu.pipeline_mode<synchronous>, transform_indices = @transform_12, window_bounds = array<i64: 1, 32>}, {pipeline_mode = #tpu.pipeline_mode<synchronous>, transform_indices = @transform_13, window_bounds = array<i64: 1, 32>}, {pipeline_mode = #tpu.pipeline_mode<synchronous>, transform_indices = @transform_14, window_bounds = array<i64: 1, 1>}, {transform_indices = @transform_15, window_bounds = array<i64: 2, 128>}, {pipeline_mode = #tpu.pipeline_mode<synchronous>, transform_indices = @transform_16, window_bounds = array<i64: 2, 128>}]} {
    %c0_i32 = arith.constant 0 : i32
    %0 = arith.cmpi eq, %arg0, %c0_i32 : i32
    %c0_i32_0 = arith.constant 0 : i32
    %1 = arith.cmpi eq, %arg1, %c0_i32_0 : i32
    %2 = arith.andi %0, %1 : i1
    %3 = arith.extui %2 : i1 to i32
    %c0_i32_1 = arith.constant 0 : i32
    %4 = arith.cmpi ne, %3, %c0_i32_1 : i32
    scf.if %4 {
      %c0_13 = arith.constant 0 : index
      %c0_14 = arith.constant 0 : index
      %22 = vector.load %arg4[%c0_13, %c0_14] : memref<2x32xf32, #tpu.memory_space<vmem>>, vector<2x32xf32>
      %c0_15 = arith.constant 0 : index
      %c0_16 = arith.constant 0 : index
      %23 = vector.load %arg5[%c0_15, %c0_16] : memref<2x32xf32, #tpu.memory_space<vmem>>, vector<2x32xf32>
      %c0_17 = arith.constant 0 : index
      %c0_18 = arith.constant 0 : index
      %24 = vector.load %arg6[%c0_17, %c0_18] : memref<2x32xf32, #tpu.memory_space<vmem>>, vector<2x32xf32>
      %c0_19 = arith.constant 0 : index
      %c0_20 = arith.constant 0 : index
      %25 = vector.load %arg7[%c0_19, %c0_20] : memref<64x128xf32, #tpu.memory_space<vmem>>, vector<64x128xf32>
      %c0_21 = arith.constant 0 : index
      %26 = memref.load %arg2[%c0_21] : memref<2xi32, #tpu.memory_space<smem>>
      %27 = arith.index_cast %26 : i32 to index
      %c0_22 = arith.constant 0 : index
      %28 = vector.load %arg3[%27, %c0_22] : memref<512x32xf32, #tpu.memory_space<vmem>>, vector<1x32xf32>
      %c1 = arith.constant 1 : index
      %29 = memref.load %arg2[%c1] : memref<2xi32, #tpu.memory_space<smem>>
      %30 = arith.index_cast %29 : i32 to index
      %c0_23 = arith.constant 0 : index
      %31 = vector.load %arg3[%30, %c0_23] : memref<512x32xf32, #tpu.memory_space<vmem>>, vector<1x32xf32>
      %32 = tpu.concatenate %28, %31 in 0 : vector<1x32xf32>, vector<1x32xf32> -> vector<2x32xf32>
      %33 = tpu.concatenate %32, %22 in 1 : vector<2x32xf32>, vector<2x32xf32> -> vector<2x64xf32>
      %cst_24 = arith.constant dense<0.000000e+00> : vector<2x128xf32>
      %34 = tpu.matmul %33, %25, %cst_24 {dimension_numbers = #tpu.dot_dimension_numbers<[1], [0], [0], [1], [0, 0, 1, 1], [], []>, precision = #tpu.contract_precision<fp32>} : vector<2x64xf32>, vector<64x128xf32>, vector<2x128xf32> -> vector<2x128xf32>
      %c0_25 = arith.constant 0 : index
      %c0_26 = arith.constant 0 : index
      %35 = vector.load %arg8[%c0_25, %c0_26] : memref<1x128xf32, #tpu.memory_space<vmem>>, vector<1x128xf32>
      %36 = vector.broadcast %35 : vector<1x128xf32> to vector<2x128xf32>
      %37 = arith.addf %34, %36 : vector<2x128xf32>
      %38 = vector.extract_strided_slice %37 {offsets = [0, 0], sizes = [2, 32], strides = [1, 1]} : vector<2x128xf32> to vector<2x32xf32>
      %39 = math.absf %38 : vector<2x32xf32>
      %cst_27 = arith.constant 0.000000e+00 : f32
      %40 = vector.broadcast %cst_27 : f32 to vector<2x32xf32>
      %41 = arith.subf %40, %39 : vector<2x32xf32>
      %42 = math.exp %41 : vector<2x32xf32>
      %cst_28 = arith.constant 1.000000e+00 : f32
      %43 = vector.broadcast %cst_28 : f32 to vector<2x32xf32>
      %44 = arith.addf %43, %42 : vector<2x32xf32>
      %cst_29 = arith.constant 1.000000e+00 : f32
      %45 = vector.broadcast %cst_29 : f32 to vector<2x32xf32>
      %46 = arith.divf %45, %44 : vector<2x32xf32>
      %cst_30 = arith.constant 0.000000e+00 : f32
      %47 = vector.broadcast %cst_30 : f32 to vector<2x32xf32>
      %48 = arith.cmpf oge, %38, %47 : vector<2x32xf32>
      %cst_31 = arith.constant 1.000000e+00 : f32
      %49 = vector.broadcast %cst_31 : f32 to vector<2x32xf32>
      %50 = arith.subf %49, %46 : vector<2x32xf32>
      %51 = arith.select %48, %46, %50 : vector<2x32xi1>, vector<2x32xf32>
      %52 = vector.extract_strided_slice %37 {offsets = [0, 32], sizes = [2, 32], strides = [1, 1]} : vector<2x128xf32> to vector<2x32xf32>
      %53 = math.absf %52 : vector<2x32xf32>
      %cst_32 = arith.constant 0.000000e+00 : f32
      %54 = vector.broadcast %cst_32 : f32 to vector<2x32xf32>
      %55 = arith.subf %54, %53 : vector<2x32xf32>
      %56 = math.exp %55 : vector<2x32xf32>
      %cst_33 = arith.constant 1.000000e+00 : f32
      %57 = vector.broadcast %cst_33 : f32 to vector<2x32xf32>
      %58 = arith.addf %57, %56 : vector<2x32xf32>
      %cst_34 = arith.constant 1.000000e+00 : f32
      %59 = vector.broadcast %cst_34 : f32 to vector<2x32xf32>
      %60 = arith.divf %59, %58 : vector<2x32xf32>
      %cst_35 = arith.constant 0.000000e+00 : f32
      %61 = vector.broadcast %cst_35 : f32 to vector<2x32xf32>
      %62 = arith.cmpf oge, %52, %61 : vector<2x32xf32>
      %cst_36 = arith.constant 1.000000e+00 : f32
      %63 = vector.broadcast %cst_36 : f32 to vector<2x32xf32>
      %64 = arith.subf %63, %60 : vector<2x32xf32>
      %65 = arith.select %62, %60, %64 : vector<2x32xi1>, vector<2x32xf32>
      %66 = vector.extract_strided_slice %37 {offsets = [0, 64], sizes = [2, 32], strides = [1, 1]} : vector<2x128xf32> to vector<2x32xf32>
      %67 = math.tanh %66 : vector<2x32xf32>
      %68 = vector.extract_strided_slice %37 {offsets = [0, 96], sizes = [2, 32], strides = [1, 1]} : vector<2x128xf32> to vector<2x32xf32>
      %69 = math.absf %68 : vector<2x32xf32>
      %cst_37 = arith.constant 0.000000e+00 : f32
      %70 = vector.broadcast %cst_37 : f32 to vector<2x32xf32>
      %71 = arith.subf %70, %69 : vector<2x32xf32>
      %72 = math.exp %71 : vector<2x32xf32>
      %cst_38 = arith.constant 1.000000e+00 : f32
      %73 = vector.broadcast %cst_38 : f32 to vector<2x32xf32>
      %74 = arith.addf %73, %72 : vector<2x32xf32>
      %cst_39 = arith.constant 1.000000e+00 : f32
      %75 = vector.broadcast %cst_39 : f32 to vector<2x32xf32>
      %76 = arith.divf %75, %74 : vector<2x32xf32>
      %cst_40 = arith.constant 0.000000e+00 : f32
      %77 = vector.broadcast %cst_40 : f32 to vector<2x32xf32>
      %78 = arith.cmpf oge, %68, %77 : vector<2x32xf32>
      %cst_41 = arith.constant 1.000000e+00 : f32
      %79 = vector.broadcast %cst_41 : f32 to vector<2x32xf32>
      %80 = arith.subf %79, %76 : vector<2x32xf32>
      %81 = arith.select %78, %76, %80 : vector<2x32xi1>, vector<2x32xf32>
      %82 = arith.mulf %65, %23 : vector<2x32xf32>
      %83 = arith.mulf %51, %67 : vector<2x32xf32>
      %84 = arith.addf %82, %83 : vector<2x32xf32>
      %85 = math.tanh %84 : vector<2x32xf32>
      %86 = arith.mulf %81, %85 : vector<2x32xf32>
      %c0_42 = arith.constant 0 : index
      %c0_43 = arith.constant 0 : index
      %87 = vector.load %arg9[%c0_42, %c0_43] : memref<32x16xf32, #tpu.memory_space<vmem>>, vector<32x16xf32>
      %cst_44 = arith.constant dense<0.000000e+00> : vector<2x16xf32>
      %88 = tpu.matmul %86, %87, %cst_44 {dimension_numbers = #tpu.dot_dimension_numbers<[1], [0], [0], [1], [0, 0, 1, 1], [], []>, precision = #tpu.contract_precision<fp32>} : vector<2x32xf32>, vector<32x16xf32>, vector<2x16xf32> -> vector<2x16xf32>
      %c0_45 = arith.constant 0 : index
      %c0_46 = arith.constant 0 : index
      %89 = vector.load %arg10[%c0_45, %c0_46] : memref<32x16xf32, #tpu.memory_space<vmem>>, vector<32x16xf32>
      %cst_47 = arith.constant dense<0.000000e+00> : vector<2x16xf32>
      %90 = tpu.matmul %24, %89, %cst_47 {dimension_numbers = #tpu.dot_dimension_numbers<[1], [0], [0], [1], [0, 0, 1, 1], [], []>, precision = #tpu.contract_precision<fp32>} : vector<2x32xf32>, vector<32x16xf32>, vector<2x16xf32> -> vector<2x16xf32>
      %91 = arith.addf %88, %90 : vector<2x16xf32>
      %c0_48 = arith.constant 0 : index
      %c0_49 = arith.constant 0 : index
      %92 = vector.load %arg11[%c0_48, %c0_49] : memref<1x16xf32, #tpu.memory_space<vmem>>, vector<1x16xf32>
      %93 = vector.broadcast %92 : vector<1x16xf32> to vector<2x16xf32>
      %94 = arith.addf %91, %93 : vector<2x16xf32>
      %c0_50 = arith.constant 0 : index
      %c0_51 = arith.constant 0 : index
      %95 = vector.load %arg20[%c0_50, %c0_51] : memref<2x16xf32, #tpu.memory_space<vmem>>, vector<2x16xf32>
      tpu.vector_store %arg20[%c0_50, %c0_51], %94 {strides = array<i32>} : memref<2x16xf32, #tpu.memory_space<vmem>>, vector<2x16xf32>,
      %cst_52 = arith.constant 0xFF800000 : f32
      %96 = vector.broadcast %cst_52 : f32 to vector<2x1xf32>
      %c0_53 = arith.constant 0 : index
      %c0_54 = arith.constant 0 : index
      %97 = vector.load %arg21[%c0_53, %c0_54] : memref<2x1xf32, #tpu.memory_space<vmem>>, vector<2x1xf32>
      tpu.vector_store %arg21[%c0_53, %c0_54], %96 {strides = array<i32>} : memref<2x1xf32, #tpu.memory_space<vmem>>, vector<2x1xf32>,
      %cst_55 = arith.constant 0.000000e+00 : f32
      %98 = vector.broadcast %cst_55 : f32 to vector<2x1xf32>
      %c0_56 = arith.constant 0 : index
      %c0_57 = arith.constant 0 : index
      %99 = vector.load %arg22[%c0_56, %c0_57] : memref<2x1xf32, #tpu.memory_space<vmem>>, vector<2x1xf32>
      tpu.vector_store %arg22[%c0_56, %c0_57], %98 {strides = array<i32>} : memref<2x1xf32, #tpu.memory_space<vmem>>, vector<2x1xf32>,
      %cst_58 = arith.constant 0.000000e+00 : f32
      %100 = vector.broadcast %cst_58 : f32 to vector<2x128xf32>
      %c0_59 = arith.constant 0 : index
      %c0_60 = arith.constant 0 : index
      %101 = vector.load %arg19[%c0_59, %c0_60] : memref<2x128xf32, #tpu.memory_space<vmem>>, vector<2x128xf32>
      tpu.vector_store %arg19[%c0_59, %c0_60], %100 {strides = array<i32>} : memref<2x128xf32, #tpu.memory_space<vmem>>, vector<2x128xf32>,
      %c0_61 = arith.constant 0 : index
      %c0_62 = arith.constant 0 : index
      %102 = vector.load %arg19[%c0_61, %c0_62] : memref<2x128xf32, #tpu.memory_space<vmem>>, vector<2x32xf32>
      tpu.vector_store %arg19[%c0_61, %c0_62], %86 {strides = array<i32>} : memref<2x128xf32, #tpu.memory_space<vmem>>, vector<2x32xf32>,
      %c0_63 = arith.constant 0 : index
      %c32 = arith.constant 32 : index
      %103 = vector.load %arg19[%c0_63, %c32] : memref<2x128xf32, #tpu.memory_space<vmem>>, vector<2x32xf32>
      tpu.vector_store %arg19[%c0_63, %c32], %84 {strides = array<i32>} : memref<2x128xf32, #tpu.memory_space<vmem>>, vector<2x32xf32>,
      %c0_64 = arith.constant 0 : index
      %c0_65 = arith.constant 0 : index
      %104 = vector.load %arg14[%c0_64, %c0_65] : memref<1x32xf32, #tpu.memory_space<vmem>>, vector<1x32xf32>
      %105 = vector.broadcast %104 : vector<1x32xf32> to vector<2x32xf32>
      %106 = arith.mulf %24, %105 : vector<2x32xf32>
      %cst_66 = arith.constant dense<0.000000e+00> : vector<2xf32>
      %107 = vector.multi_reduction <add>, %106, %cst_66 [1] : vector<2x32xf32> to vector<2xf32>
      %108 = vector.shape_cast %107 : vector<2xf32> to vector<2x1xf32>
      %c0_67 = arith.constant 0 : index
      %c0_68 = arith.constant 0 : index
      %109 = vector.load %arg15[%c0_67, %c0_68] : memref<1x32xf32, #tpu.memory_space<vmem>>, vector<1x32xf32>
      %110 = vector.broadcast %109 : vector<1x32xf32> to vector<2x32xf32>
      %111 = arith.mulf %86, %110 : vector<2x32xf32>
      %cst_69 = arith.constant dense<0.000000e+00> : vector<2xf32>
      %112 = vector.multi_reduction <add>, %111, %cst_69 [1] : vector<2x32xf32> to vector<2xf32>
      %113 = vector.shape_cast %112 : vector<2xf32> to vector<2x1xf32>
      %114 = arith.addf %108, %113 : vector<2x1xf32>
      %c0_70 = arith.constant 0 : index
      %c0_71 = arith.constant 0 : index
      %115 = vector.load %arg16[%c0_70, %c0_71] : memref<1x32xf32, #tpu.memory_space<vmem>>, vector<1x32xf32>
      %116 = vector.broadcast %115 : vector<1x32xf32> to vector<2x32xf32>
      %117 = arith.mulf %32, %116 : vector<2x32xf32>
      %cst_72 = arith.constant dense<0.000000e+00> : vector<2xf32>
      %118 = vector.multi_reduction <add>, %117, %cst_72 [1] : vector<2x32xf32> to vector<2xf32>
      %119 = vector.shape_cast %118 : vector<2xf32> to vector<2x1xf32>
      %120 = arith.addf %114, %119 : vector<2x1xf32>
      %c0_73 = arith.constant 0 : index
      %c0_74 = arith.constant 0 : index
      %121 = vector.load %arg17[%c0_73, %c0_74] : memref<1x1xf32, #tpu.memory_space<vmem>>, vector<1x1xf32>
      %122 = vector.broadcast %121 : vector<1x1xf32> to vector<2x1xf32>
      %123 = arith.addf %120, %122 : vector<2x1xf32>
      %124 = math.absf %123 : vector<2x1xf32>
      %cst_75 = arith.constant 0.000000e+00 : f32
      %125 = vector.broadcast %cst_75 : f32 to vector<2x1xf32>
      %126 = arith.subf %125, %124 : vector<2x1xf32>
      %127 = math.exp %126 : vector<2x1xf32>
      %cst_76 = arith.constant 1.000000e+00 : f32
      %128 = vector.broadcast %cst_76 : f32 to vector<2x1xf32>
      %129 = arith.addf %128, %127 : vector<2x1xf32>
      %cst_77 = arith.constant 1.000000e+00 : f32
      %130 = vector.broadcast %cst_77 : f32 to vector<2x1xf32>
      %131 = arith.divf %130, %129 : vector<2x1xf32>
      %cst_78 = arith.constant 0.000000e+00 : f32
      %132 = vector.broadcast %cst_78 : f32 to vector<2x1xf32>
      %133 = arith.cmpf oge, %123, %132 : vector<2x1xf32>
      %cst_79 = arith.constant 1.000000e+00 : f32
      %134 = vector.broadcast %cst_79 : f32 to vector<2x1xf32>
      %135 = arith.subf %134, %131 : vector<2x1xf32>
      %136 = arith.select %133, %131, %135 : vector<2x1xi1>, vector<2x1xf32>
      %c0_80 = arith.constant 0 : index
      %c64 = arith.constant 64 : index
      %137 = vector.load %arg19[%c0_80, %c64] : memref<2x128xf32, #tpu.memory_space<vmem>>, vector<2x1xf32>
      tpu.vector_store %arg19[%c0_80, %c64], %136 {strides = array<i32>} : memref<2x128xf32, #tpu.memory_space<vmem>>, vector<2x1xf32>,
    } else {
    }
    %c0 = arith.constant 0 : index
    %c0_2 = arith.constant 0 : index
    %5 = vector.load %arg20[%c0, %c0_2] : memref<2x16xf32, #tpu.memory_space<vmem>>, vector<2x16xf32>
    %c0_3 = arith.constant 0 : index
    %c0_4 = arith.constant 0 : index
    %6 = vector.load %arg12[%c0_3, %c0_4] : memref<16x128xf32, #tpu.memory_space<vmem>>, vector<16x128xf32>
    %cst = arith.constant dense<0.000000e+00> : vector<2x128xf32>
    %7 = tpu.matmul %5, %6, %cst {dimension_numbers = #tpu.dot_dimension_numbers<[1], [0], [0], [1], [0, 0, 1, 1], [], []>, precision = #tpu.contract_precision<fp32>} : vector<2x16xf32>, vector<16x128xf32>, vector<2x128xf32> -> vector<2x128xf32>
    %c0_5 = arith.constant 0 : index
    %c0_6 = arith.constant 0 : index
    %8 = vector.load %arg13[%c0_5, %c0_6] : memref<1x128xf32, #tpu.memory_space<vmem>>, vector<1x128xf32>
    %9 = vector.broadcast %8 : vector<1x128xf32> to vector<2x128xf32>
    %10 = arith.addf %7, %9 : vector<2x128xf32>
    %c0_i32_7 = arith.constant 0 : i32
    %11 = arith.cmpi eq, %arg0, %c0_i32_7 : i32
    %12 = arith.extui %11 : i1 to i32
    %c0_i32_8 = arith.constant 0 : i32
    %13 = arith.cmpi ne, %12, %c0_i32_8 : i32
    scf.if %13 {
      %c0_13 = arith.constant 0 : index
      %c0_14 = arith.constant 0 : index
      %22 = vector.load %arg21[%c0_13, %c0_14] : memref<2x1xf32, #tpu.memory_space<vmem>>, vector<2x1xf32>
      %cst_15 = arith.constant dense<0xFF800000> : vector<2xf32>
      %23 = vector.multi_reduction <maximumf>, %10, %cst_15 [1] : vector<2x128xf32> to vector<2xf32>
      %24 = vector.shape_cast %23 : vector<2xf32> to vector<2x1xf32>
      %25 = arith.maximumf %22, %24 : vector<2x1xf32>
      %26 = vector.broadcast %25 : vector<2x1xf32> to vector<2x128xf32>
      %27 = arith.subf %10, %26 : vector<2x128xf32>
      %28 = math.exp %27 : vector<2x128xf32>
      %c0_16 = arith.constant 0 : index
      %c0_17 = arith.constant 0 : index
      %29 = vector.load %arg22[%c0_16, %c0_17] : memref<2x1xf32, #tpu.memory_space<vmem>>, vector<2x1xf32>
      %30 = arith.subf %22, %25 : vector<2x1xf32>
      %31 = math.exp %30 : vector<2x1xf32>
      %32 = arith.mulf %29, %31 : vector<2x1xf32>
      %cst_18 = arith.constant dense<0.000000e+00> : vector<2xf32>
      %33 = vector.multi_reduction <add>, %28, %cst_18 [1] : vector<2x128xf32> to vector<2xf32>
      %34 = vector.shape_cast %33 : vector<2xf32> to vector<2x1xf32>
      %35 = arith.addf %32, %34 : vector<2x1xf32>
      %c0_19 = arith.constant 0 : index
      %c0_20 = arith.constant 0 : index
      %36 = vector.load %arg22[%c0_19, %c0_20] : memref<2x1xf32, #tpu.memory_space<vmem>>, vector<2x1xf32>
      tpu.vector_store %arg22[%c0_19, %c0_20], %35 {strides = array<i32>} : memref<2x1xf32, #tpu.memory_space<vmem>>, vector<2x1xf32>,
      %c0_21 = arith.constant 0 : index
      %c0_22 = arith.constant 0 : index
      %37 = vector.load %arg21[%c0_21, %c0_22] : memref<2x1xf32, #tpu.memory_space<vmem>>, vector<2x1xf32>
      tpu.vector_store %arg21[%c0_21, %c0_22], %25 {strides = array<i32>} : memref<2x1xf32, #tpu.memory_space<vmem>>, vector<2x1xf32>,
      %c0_23 = arith.constant 0 : index
      %c0_24 = arith.constant 0 : index
      %38 = vector.load %arg18[%c0_23, %c0_24] : memref<2x128xf32, #tpu.memory_space<vmem>>, vector<2x128xf32>
      tpu.vector_store %arg18[%c0_23, %c0_24], %28 {strides = array<i32>} : memref<2x128xf32, #tpu.memory_space<vmem>>, vector<2x128xf32>,
    } else {
    }
    %c1_i32 = arith.constant 1 : i32
    %14 = arith.cmpi eq, %arg0, %c1_i32 : i32
    %c0_i32_9 = arith.constant 0 : i32
    %15 = arith.cmpi eq, %arg1, %c0_i32_9 : i32
    %16 = arith.andi %14, %15 : i1
    %17 = arith.extui %16 : i1 to i32
    %c0_i32_10 = arith.constant 0 : i32
    %18 = arith.cmpi ne, %17, %c0_i32_10 : i32
    scf.if %18 {
      %c0_13 = arith.constant 0 : index
      %c0_14 = arith.constant 0 : index
      %22 = vector.load %arg22[%c0_13, %c0_14] : memref<2x1xf32, #tpu.memory_space<vmem>>, vector<2x1xf32>
      %23 = tpu.reciprocal %22 {approx = true} : vector<2x1xf32> -> vector<2x1xf32>
      %c0_15 = arith.constant 0 : index
      %c0_16 = arith.constant 0 : index
      %24 = vector.load %arg22[%c0_15, %c0_16] : memref<2x1xf32, #tpu.memory_space<vmem>>, vector<2x1xf32>
      tpu.vector_store %arg22[%c0_15, %c0_16], %23 {strides = array<i32>} : memref<2x1xf32, #tpu.memory_space<vmem>>, vector<2x1xf32>,
    } else {
    }
    %c1_i32_11 = arith.constant 1 : i32
    %19 = arith.cmpi eq, %arg0, %c1_i32_11 : i32
    %20 = arith.extui %19 : i1 to i32
    %c0_i32_12 = arith.constant 0 : i32
    %21 = arith.cmpi ne, %20, %c0_i32_12 : i32
    scf.if %21 {
      %c0_13 = arith.constant 0 : index
      %c0_14 = arith.constant 0 : index
      %22 = vector.load %arg21[%c0_13, %c0_14] : memref<2x1xf32, #tpu.memory_space<vmem>>, vector<2x1xf32>
      %23 = vector.broadcast %22 : vector<2x1xf32> to vector<2x128xf32>
      %24 = arith.subf %10, %23 : vector<2x128xf32>
      %25 = math.exp %24 : vector<2x128xf32>
      %c0_15 = arith.constant 0 : index
      %c0_16 = arith.constant 0 : index
      %26 = vector.load %arg22[%c0_15, %c0_16] : memref<2x1xf32, #tpu.memory_space<vmem>>, vector<2x1xf32>
      %27 = vector.broadcast %26 : vector<2x1xf32> to vector<2x128xf32>
      %28 = arith.mulf %25, %27 : vector<2x128xf32>
      %c0_17 = arith.constant 0 : index
      %c0_18 = arith.constant 0 : index
      %29 = vector.load %arg18[%c0_17, %c0_18] : memref<2x128xf32, #tpu.memory_space<vmem>>, vector<2x128xf32>
      tpu.vector_store %arg18[%c0_17, %c0_18], %28 {strides = array<i32>} : memref<2x128xf32, #tpu.memory_space<vmem>>, vector<2x128xf32>,
    } else {
    }
    return
  }
  func.func @transform_0(%arg0: i32, %arg1: i32, %arg2: memref<2xi32, #tpu.memory_space<smem>>) -> (i32, i32) {
    %c0_i32 = arith.constant 0 : i32
    %c0_i32_0 = arith.constant 0 : i32
    %c0_i32_1 = arith.constant 0 : i32
    return %c0_i32, %c0_i32_0 : i32, i32
  }
  func.func @transform_1(%arg0: i32, %arg1: i32, %arg2: memref<2xi32, #tpu.memory_space<smem>>) -> (i32, i32) {
    %c0_i32 = arith.constant 0 : i32
    %c0_i32_0 = arith.constant 0 : i32
    %c0_i32_1 = arith.constant 0 : i32
    return %c0_i32, %c0_i32_0 : i32, i32
  }
  func.func @transform_2(%arg0: i32, %arg1: i32, %arg2: memref<2xi32, #tpu.memory_space<smem>>) -> (i32, i32) {
    %c0_i32 = arith.constant 0 : i32
    %c0_i32_0 = arith.constant 0 : i32
    %c0_i32_1 = arith.constant 0 : i32
    return %c0_i32, %c0_i32_0 : i32, i32
  }
  func.func @transform_3(%arg0: i32, %arg1: i32, %arg2: memref<2xi32, #tpu.memory_space<smem>>) -> (i32, i32) {
    %c0_i32 = arith.constant 0 : i32
    %c0_i32_0 = arith.constant 0 : i32
    %c0_i32_1 = arith.constant 0 : i32
    return %c0_i32, %c0_i32_0 : i32, i32
  }
  func.func @transform_4(%arg0: i32, %arg1: i32, %arg2: memref<2xi32, #tpu.memory_space<smem>>) -> (i32, i32) {
    %c0_i32 = arith.constant 0 : i32
    %c0_i32_0 = arith.constant 0 : i32
    %c0_i32_1 = arith.constant 0 : i32
    return %c0_i32, %c0_i32_0 : i32, i32
  }
  func.func @transform_5(%arg0: i32, %arg1: i32, %arg2: memref<2xi32, #tpu.memory_space<smem>>) -> (i32, i32) {
    %c0_i32 = arith.constant 0 : i32
    %c0_i32_0 = arith.constant 0 : i32
    %c0_i32_1 = arith.constant 0 : i32
    return %c0_i32, %c0_i32_0 : i32, i32
  }
  func.func @transform_6(%arg0: i32, %arg1: i32, %arg2: memref<2xi32, #tpu.memory_space<smem>>) -> (i32, i32) {
    %c0_i32 = arith.constant 0 : i32
    %c0_i32_0 = arith.constant 0 : i32
    %c0_i32_1 = arith.constant 0 : i32
    return %c0_i32, %c0_i32_0 : i32, i32
  }
  func.func @transform_7(%arg0: i32, %arg1: i32, %arg2: memref<2xi32, #tpu.memory_space<smem>>) -> (i32, i32) {
    %c0_i32 = arith.constant 0 : i32
    %c0_i32_0 = arith.constant 0 : i32
    %c0_i32_1 = arith.constant 0 : i32
    return %c0_i32, %c0_i32_0 : i32, i32
  }
  func.func @transform_8(%arg0: i32, %arg1: i32, %arg2: memref<2xi32, #tpu.memory_space<smem>>) -> (i32, i32) {
    %c0_i32 = arith.constant 0 : i32
    %c0_i32_0 = arith.constant 0 : i32
    %c0_i32_1 = arith.constant 0 : i32
    return %c0_i32, %c0_i32_0 : i32, i32
  }
  func.func @transform_9(%arg0: i32, %arg1: i32, %arg2: memref<2xi32, #tpu.memory_space<smem>>) -> (i32, i32) {
    %c0_i32 = arith.constant 0 : i32
    %c0_i32_0 = arith.constant 0 : i32
    return %c0_i32, %arg1 : i32, i32
  }
  func.func @transform_10(%arg0: i32, %arg1: i32, %arg2: memref<2xi32, #tpu.memory_space<smem>>) -> (i32, i32) {
    %c0_i32 = arith.constant 0 : i32
    %c0_i32_0 = arith.constant 0 : i32
    return %c0_i32, %arg1 : i32, i32
  }
  func.func @transform_11(%arg0: i32, %arg1: i32, %arg2: memref<2xi32, #tpu.memory_space<smem>>) -> (i32, i32) {
    %c0_i32 = arith.constant 0 : i32
    %c0_i32_0 = arith.constant 0 : i32
    %c0_i32_1 = arith.constant 0 : i32
    return %c0_i32, %c0_i32_0 : i32, i32
  }
  func.func @transform_12(%arg0: i32, %arg1: i32, %arg2: memref<2xi32, #tpu.memory_space<smem>>) -> (i32, i32) {
    %c0_i32 = arith.constant 0 : i32
    %c0_i32_0 = arith.constant 0 : i32
    %c0_i32_1 = arith.constant 0 : i32
    return %c0_i32, %c0_i32_0 : i32, i32
  }
  func.func @transform_13(%arg0: i32, %arg1: i32, %arg2: memref<2xi32, #tpu.memory_space<smem>>) -> (i32, i32) {
    %c0_i32 = arith.constant 0 : i32
    %c0_i32_0 = arith.constant 0 : i32
    %c0_i32_1 = arith.constant 0 : i32
    return %c0_i32, %c0_i32_0 : i32, i32
  }
  func.func @transform_14(%arg0: i32, %arg1: i32, %arg2: memref<2xi32, #tpu.memory_space<smem>>) -> (i32, i32) {
    %c0_i32 = arith.constant 0 : i32
    %c0_i32_0 = arith.constant 0 : i32
    %c0_i32_1 = arith.constant 0 : i32
    return %c0_i32, %c0_i32_0 : i32, i32
  }
  func.func @transform_15(%arg0: i32, %arg1: i32, %arg2: memref<2xi32, #tpu.memory_space<smem>>) -> (i32, i32) {
    %c0_i32 = arith.constant 0 : i32
    %c0_i32_0 = arith.constant 0 : i32
    return %c0_i32, %arg1 : i32, i32
  }
  func.func @transform_16(%arg0: i32, %arg1: i32, %arg2: memref<2xi32, #tpu.memory_space<smem>>) -> (i32, i32) {
    %c0_i32 = arith.constant 0 : i32
    %c0_i32_0 = arith.constant 0 : i32
    %c0_i32_1 = arith.constant 0 : i32
    return %c0_i32, %c0_i32_0 : i32, i32
  }
}

</mosaic_0001>

<llo_original>
// kernel: _decoder_forward_impl.1
$region0: #{_decoder_forward_impl.1}
  #allocation0 [shape = 'u32[]', space=smem, size = 0x4, offset = 0x4, fixed_abs, tag = 'smem constant byte address 0x4 - core index']
  #allocation1 [shape = 'u32[72,128]{1,0:T(1,128)}', space=vmem, size = 0x9000, scoped, tag = 'internal scratch']
  #allocation2 [shape = 'f32[2,16]{1,0:T(2,128)}', space=vmem, size = 0x400, scoped, tag = 'scratch operand']
  #allocation3 [shape = 'f32[2,1]{1,0:T(2,128)}', space=vmem, size = 0x400, scoped, tag = 'scratch operand']
  #allocation4 [shape = 'f32[2,1]{1,0:T(2,128)}', space=vmem, size = 0x400, scoped, tag = 'scratch operand']
  #allocation5 [shape = 's32[1]{0}', space=sflag, size = 0x4, scoped, tag = 'scoped memory for _decoder_forward_impl.1']
  #allocation6 [shape = 'u8[512]{0}', space=smem, size = 0x200, scoped, tag = 'prefetched SMEM operand 0']
  #allocation7 [shape = 'f32[1,1]{1,0:T(1,128)S(1)}', space=vmem, size = 0x200, scoped, tag = 'scoped memory for _decoder_forward_impl.1']
  %s0 = inlined_call_operand.vmem [shape: s32[2], index: 0, kind: input, shape index: {}]
  %s1 = inlined_call_operand.vmem [shape: f32[512,32], index: 1, kind: input, shape index: {}]
  %s2 = inlined_call_operand.vmem [shape: f32[2,32], index: 2, kind: input, shape index: {}]
  %s3 = inlined_call_operand.vmem [shape: f32[2,32], index: 3, kind: input, shape index: {}]
  %s4 = inlined_call_operand.vmem [shape: f32[2,32], index: 4, kind: input, shape index: {}]
  %s5 = inlined_call_operand.vmem [shape: f32[64,128], index: 5, kind: input, shape index: {}]
  %s6 = inlined_call_operand.vmem [shape: f32[1,128], index: 6, kind: input, shape index: {}]
  %s7 = inlined_call_operand.vmem [shape: f32[32,16], index: 7, kind: input, shape index: {}]
  %s8 = inlined_call_operand.vmem [shape: f32[32,16], index: 8, kind: input, shape index: {}]
  %s9 = inlined_call_operand.vmem [shape: f32[1,16], index: 9, kind: input, shape index: {}]
  %s10 = inlined_call_operand.vmem [shape: f32[16,512], index: 10, kind: input, shape index: {}]
  %s11 = inlined_call_operand.vmem [shape: f32[1,512], index: 11, kind: input, shape index: {}]
  %s12 = inlined_call_operand.vmem [shape: f32[1,32], index: 12, kind: input, shape index: {}]
  %s13 = inlined_call_operand.vmem [shape: f32[1,32], index: 13, kind: input, shape index: {}]
  %s14 = inlined_call_operand.vmem [shape: f32[1,32], index: 14, kind: input, shape index: {}]
  %s15 = inlined_call_operand.<no memory space> [shape: f32[1,1], index: 15, kind: input, shape index: {}]
  %s16 = inlined_call_operand.hbm [shape: f32[2,512], index: 16, kind: output, shape index: {0}]
  %s17 = inlined_call_operand.vmem [shape: f32[2,128], index: 17, kind: output, shape index: {1}]
  %18 = xla_tuple %s16, %s17
  %s19 = sld [smem:[#allocation0]]
  $region155: #{_decoder_forward_impl.1} parent=0
    _
  %s21 = ssub.s32 1, %s19
  %s22 = scalar_select 0, %s21, %s19
  %s24 = sshll.u32 %s0, 4
  %s25 = int_to_ptr.vmem [resolvable:$true] %s24
  %27 = dma.vmem_to_smem %s25, 16, [#allocation6], [#allocation5]
  %v28 = vstv %s15
  %29 = vst [vmem:[#allocation7] sm:$0x1] %v28
  %31 = dma.done [#allocation5], 16
  %32 = sfence
  $region1: #{_decoder_forward_impl.1} parent=0
    #allocation8 [shape = 'u8[16384]{0}', space=vmem, size = 0x4000, scoped, tag = 'input window, operand 10']
    #allocation9 [shape = 'u8[2048]{0}', space=vmem, size = 0x800, scoped, tag = 'output window, operand 0']
    #allocation10 [shape = 's32[2]{0}', space=sflag, size = 0x8, scoped, tag = 'scoped memory for _decoder_forward_impl.1']
    %33 = vsyncpa [#allocation10], 0
    %s34 = scalar_lea.sflag [#allocation10], 1
    %35 = vsyncpa %s34, 0
    loop: start=0, step=1, limit=10
    $region2: #{_decoder_forward_impl.1} parent=1 // loop_pre_header
      _
    $region3: #{_decoder_forward_impl.1} parent=1 // loop_header
      %s37 = sphi 0, %s41
      %p38 = scmp.ge.s32.totalorder %s37, 10
      %s44 = sphi 0, %s56
      %s45 = sphi 0, %s52
      %s46 = sphi 0, %s44
      %s47 = sphi 0, %s45
      %s48 = sphi 0, %s46
      %s49 = sphi 0, %s47
      %s57 = sphi 0, %s57
      %s59 = sphi 0, %s57
      %s60 = sphi 0, %s59
      %s74 = sphi 0, %s60
      %s78 = sphi 0, %s78
      %s80 = sphi 0, %s78
      %s81 = sphi 0, %s80
      %s95 = sphi 0, %s81
      %s99 = sphi 0, %s99
      %s101 = sphi 0, %s99
      %s102 = sphi 0, %s101
      %s116 = sphi 0, %s102
      %s120 = sphi 0, %s120
      %s122 = sphi 0, %s120
      %s123 = sphi 0, %s122
      %s137 = sphi 0, %s123
      %s141 = sphi 0, %s141
      %s143 = sphi 0, %s141
      %s144 = sphi 0, %s143
      %s158 = sphi 0, %s144
      %s162 = sphi 0, %s162
      %s164 = sphi 0, %s162
      %s165 = sphi 0, %s164
      %s179 = sphi 0, %s165
      %s183 = sphi 0, %s183
      %s185 = sphi 0, %s183
      %s186 = sphi 0, %s185
      %s200 = sphi 0, %s186
      %s204 = sphi 0, %s204
      %s206 = sphi 0, %s204
      %s207 = sphi 0, %s206
      %s221 = sphi 0, %s207
      %s225 = sphi 0, %s225
      %s227 = sphi 0, %s225
      %s228 = sphi 0, %s227
      %s242 = sphi 0, %s228
      %s248 = sphi 0, %s250
      %s251 = sphi 0, %s248
      %s252 = sphi 0, %s251
      %s268 = sphi 0, %s252
      %s274 = sphi 0, %s276
      %s277 = sphi 0, %s274
      %s278 = sphi 0, %s277
      %s294 = sphi 0, %s278
      %s298 = sphi 0, %s298
      %s300 = sphi 0, %s298
      %s301 = sphi 0, %s300
      %s315 = sphi 0, %s301
      %s319 = sphi 0, %s319
      %s321 = sphi 0, %s319
      %s322 = sphi 0, %s321
      %s336 = sphi 0, %s322
      %s340 = sphi 0, %s340
      %s342 = sphi 0, %s340
      %s343 = sphi 0, %s342
      %s357 = sphi 0, %s343
      %s361 = sphi 0, %s361
      %s363 = sphi 0, %s361
      %s364 = sphi 0, %s363
      %s378 = sphi 0, %s364
      %s384 = sphi 0, %s386
      %s387 = sphi 0, %s384
      %s388 = sphi 0, %s387
      %s404 = sphi 0, %s388
      %s408 = sphi 0, %s408
      %s410 = sphi 0, %s408
      %s411 = sphi 0, %s410
      %s425 = sphi 0, %s411
    $region4: #{_decoder_forward_impl.1} parent=1 // loop_header_branch
      %40 = sbr.rel (%p38) target = $region8
    $region5: #{_decoder_forward_impl.1} parent=1 // loop_body
      %s42 = ssub.s32 %s37, 1
      %s43 = ssub.s32 %s37, 2
      %s50 = sadd.s32 1, %s45
      %p51 = scmp.ge.s32.totalorder %s50, 4
      %s52 = scalar_select %p51, 0, %s50
      %s53 = sadd.s32 1, %s44
      %s54 = scalar_select %p51, %s53, %s44
      %p55 = scmp.ge.s32.totalorder %s54, 2
      %s56 = scalar_select %p55, 0, %s54
      %s58 = sadd.s32 %s57, 1
      %p61 = scmp.eq.s32.totalorder %s37, 7
      %p62 = scmp.ne.s32.totalorder %s57, %s59
      %p63 = scmp.eq.s32.totalorder %s37, 0
      %p64 = por %p62, %p63
      %p65 = scmp.ne.s32.totalorder %s57, %s59
      %p66 = scmp.eq.s32.totalorder %s42, 7
      %p67 = por %p65, %p66
      %p68 = scmp.ne.s32.totalorder %s59, %s60
      %p69 = scmp.eq.s32.totalorder %s42, 0
      %p70 = por %p68, %p69
      %p71 = scmp.ne.s32.totalorder %s59, %s60
      %p72 = scmp.eq.s32.totalorder %s43, 7
      %p73 = por %p71, %p72
      %p75 = scmp.ne.s32.totalorder %s60, %s74
      %p76 = scmp.eq.s32.totalorder %s43, 0
      %p77 = por %p75, %p76
      %s79 = sadd.s32 %s78, 1
      %p82 = scmp.eq.s32.totalorder %s37, 7
      %p83 = scmp.ne.s32.totalorder %s78, %s80
      %p84 = scmp.eq.s32.totalorder %s37, 0
      %p85 = por %p83, %p84
      %p86 = scmp.ne.s32.totalorder %s78, %s80
      %p87 = scmp.eq.s32.totalorder %s42, 7
      %p88 = por %p86, %p87
      %p89 = scmp.ne.s32.totalorder %s80, %s81
      %p90 = scmp.eq.s32.totalorder %s42, 0
      %p91 = por %p89, %p90
      %p92 = scmp.ne.s32.totalorder %s80, %s81
      %p93 = scmp.eq.s32.totalorder %s43, 7
      %p94 = por %p92, %p93
      %p96 = scmp.ne.s32.totalorder %s81, %s95
      %p97 = scmp.eq.s32.totalorder %s43, 0
      %p98 = por %p96, %p97
      %s100 = sadd.s32 %s99, 1
      %p103 = scmp.eq.s32.totalorder %s37, 7
      %p104 = scmp.ne.s32.totalorder %s99, %s101
      %p105 = scmp.eq.s32.totalorder %s37, 0
      %p106 = por %p104, %p105
      %p107 = scmp.ne.s32.totalorder %s99, %s101
      %p108 = scmp.eq.s32.totalorder %s42, 7
      %p109 = por %p107, %p108
      %p110 = scmp.ne.s32.totalorder %s101, %s102
      %p111 = scmp.eq.s32.totalorder %s42, 0
      %p112 = por %p110, %p111
      %p113 = scmp.ne.s32.totalorder %s101, %s102
      %p114 = scmp.eq.s32.totalorder %s43, 7
      %p115 = por %p113, %p114
      %p117 = scmp.ne.s32.totalorder %s102, %s116
      %p118 = scmp.eq.s32.totalorder %s43, 0
      %p119 = por %p117, %p118
      %s121 = sadd.s32 %s120, 1
      %p124 = scmp.eq.s32.totalorder %s37, 7
      %p125 = scmp.ne.s32.totalorder %s120, %s122
      %p126 = scmp.eq.s32.totalorder %s37, 0
      %p127 = por %p125, %p126
      %p128 = scmp.ne.s32.totalorder %s120, %s122
      %p129 = scmp.eq.s32.totalorder %s42, 7
      %p130 = por %p128, %p129
      %p131 = scmp.ne.s32.totalorder %s122, %s123
      %p132 = scmp.eq.s32.totalorder %s42, 0
      %p133 = por %p131, %p132
      %p134 = scmp.ne.s32.totalorder %s122, %s123
      %p135 = scmp.eq.s32.totalorder %s43, 7
      %p136 = por %p134, %p135
      %p138 = scmp.ne.s32.totalorder %s123, %s137
      %p139 = scmp.eq.s32.totalorder %s43, 0
      %p140 = por %p138, %p139
      %s142 = sadd.s32 %s141, 1
      %p145 = scmp.eq.s32.totalorder %s37, 7
      %p146 = scmp.ne.s32.totalorder %s141, %s143
      %p147 = scmp.eq.s32.totalorder %s37, 0
      %p148 = por %p146, %p147
      %p149 = scmp.ne.s32.totalorder %s141, %s143
      %p150 = scmp.eq.s32.totalorder %s42, 7
      %p151 = por %p149, %p150
      %p152 = scmp.ne.s32.totalorder %s143, %s144
      %p153 = scmp.eq.s32.totalorder %s42, 0
      %p154 = por %p152, %p153
      %p155 = scmp.ne.s32.totalorder %s143, %s144
      %p156 = scmp.eq.s32.totalorder %s43, 7
      %p157 = por %p155, %p156
      %p159 = scmp.ne.s32.totalorder %s144, %s158
      %p160 = scmp.eq.s32.totalorder %s43, 0
      %p161 = por %p159, %p160
      %s163 = sadd.s32 %s162, 1
      %p166 = scmp.eq.s32.totalorder %s37, 7
      %p167 = scmp.ne.s32.totalorder %s162, %s164
      %p168 = scmp.eq.s32.totalorder %s37, 0
      %p169 = por %p167, %p168
      %p170 = scmp.ne.s32.totalorder %s162, %s164
      %p171 = scmp.eq.s32.totalorder %s42, 7
      %p172 = por %p170, %p171
      %p173 = scmp.ne.s32.totalorder %s164, %s165
      %p174 = scmp.eq.s32.totalorder %s42, 0
      %p175 = por %p173, %p174
      %p176 = scmp.ne.s32.totalorder %s164, %s165
      %p177 = scmp.eq.s32.totalorder %s43, 7
      %p178 = por %p176, %p177
      %p180 = scmp.ne.s32.totalorder %s165, %s179
      %p181 = scmp.eq.s32.totalorder %s43, 0
      %p182 = por %p180, %p181
      %s184 = sadd.s32 %s183, 1
      %p187 = scmp.eq.s32.totalorder %s37, 7
      %p188 = scmp.ne.s32.totalorder %s183, %s185
      %p189 = scmp.eq.s32.totalorder %s37, 0
      %p190 = por %p188, %p189
      %p191 = scmp.ne.s32.totalorder %s183, %s185
      %p192 = scmp.eq.s32.totalorder %s42, 7
      %p193 = por %p191, %p192
      %p194 = scmp.ne.s32.totalorder %s185, %s186
      %p195 = scmp.eq.s32.totalorder %s42, 0
      %p196 = por %p194, %p195
      %p197 = scmp.ne.s32.totalorder %s185, %s186
      %p198 = scmp.eq.s32.totalorder %s43, 7
      %p199 = por %p197, %p198
      %p201 = scmp.ne.s32.totalorder %s186, %s200
      %p202 = scmp.eq.s32.totalorder %s43, 0
      %p203 = por %p201, %p202
      %s205 = sadd.s32 %s204, 1
      %p208 = scmp.eq.s32.totalorder %s37, 7
      %p209 = scmp.ne.s32.totalorder %s204, %s206
      %p210 = scmp.eq.s32.totalorder %s37, 0
      %p211 = por %p209, %p210
      %p212 = scmp.ne.s32.totalorder %s204, %s206
      %p213 = scmp.eq.s32.totalorder %s42, 7
      %p214 = por %p212, %p213
      %p215 = scmp.ne.s32.totalorder %s206, %s207
      %p216 = scmp.eq.s32.totalorder %s42, 0
      %p217 = por %p215, %p216
      %p218 = scmp.ne.s32.totalorder %s206, %s207
      %p219 = scmp.eq.s32.totalorder %s43, 7
      %p220 = por %p218, %p219
      %p222 = scmp.ne.s32.totalorder %s207, %s221
      %p223 = scmp.eq.s32.totalorder %s43, 0
      %p224 = por %p222, %p223
      %s226 = sadd.s32 %s225, 1
      %p229 = scmp.eq.s32.totalorder %s37, 7
      %p230 = scmp.ne.s32.totalorder %s225, %s227
      %p231 = scmp.eq.s32.totalorder %s37, 0
      %p232 = por %p230, %p231
      %p233 = scmp.ne.s32.totalorder %s225, %s227
      %p234 = scmp.eq.s32.totalorder %s42, 7
      %p235 = por %p233, %p234
      %p236 = scmp.ne.s32.totalorder %s227, %s228
      %p237 = scmp.eq.s32.totalorder %s42, 0
      %p238 = por %p236, %p237
      %p239 = scmp.ne.s32.totalorder %s227, %s228
      %p240 = scmp.eq.s32.totalorder %s43, 7
      %p241 = por %p239, %p240
      %p243 = scmp.ne.s32.totalorder %s228, %s242
      %p244 = scmp.eq.s32.totalorder %s43, 0
      %p245 = por %p243, %p244
      %s246 = ssub.s32 %s45, %s52
      %p247 = scmp.eq.s32.totalorder %s246, 0
      %s249 = sadd.s32 %s248, 1
      %s250 = scalar_select %p247, %s248, %s249
      %p253 = pneg %p247
      %p254 = scmp.eq.s32.totalorder %s37, 7
      %p255 = por %p253, %p254
      %p256 = scmp.ne.s32.totalorder %s248, %s251
      %p257 = scmp.eq.s32.totalorder %s37, 0
      %p258 = por %p256, %p257
      %p259 = scmp.ne.s32.totalorder %s248, %s251
      %p260 = scmp.eq.s32.totalorder %s42, 7
      %p261 = por %p259, %p260
      %p262 = scmp.ne.s32.totalorder %s251, %s252
      %p263 = scmp.eq.s32.totalorder %s42, 0
      %p264 = por %p262, %p263
      %p265 = scmp.ne.s32.totalorder %s251, %s252
      %p266 = scmp.eq.s32.totalorder %s43, 7
      %p267 = por %p265, %p266
      %p269 = scmp.ne.s32.totalorder %s252, %s268
      %p270 = scmp.eq.s32.totalorder %s43, 0
      %p271 = por %p269, %p270
      %s272 = ssub.s32 %s45, %s52
      %p273 = scmp.eq.s32.totalorder %s272, 0
      %s275 = sadd.s32 %s274, 1
      %s276 = scalar_select %p273, %s274, %s275
      %p279 = pneg %p273
      %p280 = scmp.eq.s32.totalorder %s37, 7
      %p281 = por %p279, %p280
      %p282 = scmp.ne.s32.totalorder %s274, %s277
      %p283 = scmp.eq.s32.totalorder %s37, 0
      %p284 = por %p282, %p283
      %p285 = scmp.ne.s32.totalorder %s274, %s277
      %p286 = scmp.eq.s32.totalorder %s42, 7
      %p287 = por %p285, %p286
      %p288 = scmp.ne.s32.totalorder %s277, %s278
      %p289 = scmp.eq.s32.totalorder %s42, 0
      %p290 = por %p288, %p289
      %p291 = scmp.ne.s32.totalorder %s277, %s278
      %p292 = scmp.eq.s32.totalorder %s43, 7
      %p293 = por %p291, %p292
      %p295 = scmp.ne.s32.totalorder %s278, %s294
      %p296 = scmp.eq.s32.totalorder %s43, 0
      %p297 = por %p295, %p296
      %s299 = sadd.s32 %s298, 1
      %p302 = scmp.eq.s32.totalorder %s37, 7
      %p303 = scmp.ne.s32.totalorder %s298, %s300
      %p304 = scmp.eq.s32.totalorder %s37, 0
      %p305 = por %p303, %p304
      %p306 = scmp.ne.s32.totalorder %s298, %s300
      %p307 = scmp.eq.s32.totalorder %s42, 7
      %p308 = por %p306, %p307
      %p309 = scmp.ne.s32.totalorder %s300, %s301
      %p310 = scmp.eq.s32.totalorder %s42, 0
      %p311 = por %p309, %p310
      %p312 = scmp.ne.s32.totalorder %s300, %s301
      %p313 = scmp.eq.s32.totalorder %s43, 7
      %p314 = por %p312, %p313
      %p316 = scmp.ne.s32.totalorder %s301, %s315
      %p317 = scmp.eq.s32.totalorder %s43, 0
      %p318 = por %p316, %p317
      %s320 = sadd.s32 %s319, 1
      %p323 = scmp.eq.s32.totalorder %s37, 7
      %p324 = scmp.ne.s32.totalorder %s319, %s321
      %p325 = scmp.eq.s32.totalorder %s37, 0
      %p326 = por %p324, %p325
      %p327 = scmp.ne.s32.totalorder %s319, %s321
      %p328 = scmp.eq.s32.totalorder %s42, 7
      %p329 = por %p327, %p328
      %p330 = scmp.ne.s32.totalorder %s321, %s322
      %p331 = scmp.eq.s32.totalorder %s42, 0
      %p332 = por %p330, %p331
      %p333 = scmp.ne.s32.totalorder %s321, %s322
      %p334 = scmp.eq.s32.totalorder %s43, 7
      %p335 = por %p333, %p334
      %p337 = scmp.ne.s32.totalorder %s322, %s336
      %p338 = scmp.eq.s32.totalorder %s43, 0
      %p339 = por %p337, %p338
      %s341 = sadd.s32 %s340, 1
      %p344 = scmp.eq.s32.totalorder %s37, 7
      %p345 = scmp.ne.s32.totalorder %s340, %s342
      %p346 = scmp.eq.s32.totalorder %s37, 0
      %p347 = por %p345, %p346
      %p348 = scmp.ne.s32.totalorder %s340, %s342
      %p349 = scmp.eq.s32.totalorder %s42, 7
      %p350 = por %p348, %p349
      %p351 = scmp.ne.s32.totalorder %s342, %s343
      %p352 = scmp.eq.s32.totalorder %s42, 0
      %p353 = por %p351, %p352
      %p354 = scmp.ne.s32.totalorder %s342, %s343
      %p355 = scmp.eq.s32.totalorder %s43, 7
      %p356 = por %p354, %p355
      %p358 = scmp.ne.s32.totalorder %s343, %s357
      %p359 = scmp.eq.s32.totalorder %s43, 0
      %p360 = por %p358, %p359
      %s362 = sadd.s32 %s361, 1
      %p365 = scmp.eq.s32.totalorder %s37, 7
      %p366 = scmp.ne.s32.totalorder %s361, %s363
      %p367 = scmp.eq.s32.totalorder %s37, 0
      %p368 = por %p366, %p367
      %p369 = scmp.ne.s32.totalorder %s361, %s363
      %p370 = scmp.eq.s32.totalorder %s42, 7
      %p371 = por %p369, %p370
      %p372 = scmp.ne.s32.totalorder %s363, %s364
      %p373 = scmp.eq.s32.totalorder %s42, 0
      %p374 = por %p372, %p373
      %p375 = scmp.ne.s32.totalorder %s363, %s364
      %p376 = scmp.eq.s32.totalorder %s43, 7
      %p377 = por %p375, %p376
      %p379 = scmp.ne.s32.totalorder %s364, %s378
      %p380 = scmp.eq.s32.totalorder %s43, 0
      %p381 = por %p379, %p380
      %s382 = ssub.s32 %s45, %s52
      %p383 = scmp.eq.s32.totalorder %s382, 0
      %s385 = sadd.s32 %s384, 1
      %s386 = scalar_select %p383, %s384, %s385
      %p389 = pneg %p383
      %p390 = scmp.eq.s32.totalorder %s37, 7
      %p391 = por %p389, %p390
      %p392 = scmp.ne.s32.totalorder %s384, %s387
      %p393 = scmp.eq.s32.totalorder %s37, 0
      %p394 = por %p392, %p393
      %p395 = scmp.ne.s32.totalorder %s384, %s387
      %p396 = scmp.eq.s32.totalorder %s42, 7
      %p397 = por %p395, %p396
      %p398 = scmp.ne.s32.totalorder %s387, %s388
      %p399 = scmp.eq.s32.totalorder %s42, 0
      %p400 = por %p398, %p399
      %p401 = scmp.ne.s32.totalorder %s387, %s388
      %p402 = scmp.eq.s32.totalorder %s43, 7
      %p403 = por %p401, %p402
      %p405 = scmp.ne.s32.totalorder %s388, %s404
      %p406 = scmp.eq.s32.totalorder %s43, 0
      %p407 = por %p405, %p406
      %s409 = sadd.s32 %s408, 1
      %p412 = scmp.eq.s32.totalorder %s37, 7
      %p413 = scmp.ne.s32.totalorder %s408, %s410
      %p414 = scmp.eq.s32.totalorder %s37, 0
      %p415 = por %p413, %p414
      %p416 = scmp.ne.s32.totalorder %s408, %s410
      %p417 = scmp.eq.s32.totalorder %s42, 7
      %p418 = por %p416, %p417
      %p419 = scmp.ne.s32.totalorder %s410, %s411
      %p420 = scmp.eq.s32.totalorder %s42, 0
      %p421 = por %p419, %p420
      %p422 = scmp.ne.s32.totalorder %s410, %s411
      %p423 = scmp.eq.s32.totalorder %s43, 7
      %p424 = por %p422, %p423
      %p426 = scmp.ne.s32.totalorder %s411, %s425
      %p427 = scmp.eq.s32.totalorder %s43, 0
      %p428 = por %p426, %p427
      %p429 = scmp.le.s32.totalorder 1, %s37
      %p430 = scmp.lt.s32.totalorder %s37, 9
      %p431 = pnand %p429, %p430
      %p432 = pneg %p431
      // Predicated region
      $region9: #{_decoder_forward_impl.1} parent=5 // pred_check
        _
      $region10: #{_decoder_forward_impl.1} parent=5 // pred_check_branch
        %434 = sbr.rel (%p431) target = $region12
      $region11: #{_decoder_forward_impl.1} parent=5 // pred_region
        %s435 = ssub.s32 %s37, 1
        // Predicated region
        $region13: #{_decoder_forward_impl.1} parent=11 // pred_check
          %p436 = pneg %p70
        $region14: #{_decoder_forward_impl.1} parent=11 // pred_check_branch
          %438 = sbr.rel (%p436) target = $region16
        $region15: #{_decoder_forward_impl.1} parent=11 // pred_region
          _
        $region16: #{_decoder_forward_impl.1} parent=11 // pred_fallthru
          _
        // Predicated region
        $region17: #{_decoder_forward_impl.1} parent=11 // pred_check
          %p439 = pneg %p91
        $region18: #{_decoder_forward_impl.1} parent=11 // pred_check_branch
          %441 = sbr.rel (%p439) target = $region20
        $region19: #{_decoder_forward_impl.1} parent=11 // pred_region
          _
        $region20: #{_decoder_forward_impl.1} parent=11 // pred_fallthru
          _
        // Predicated region
        $region21: #{_decoder_forward_impl.1} parent=11 // pred_check
          %p442 = pneg %p112
        $region22: #{_decoder_forward_impl.1} parent=11 // pred_check_branch
          %444 = sbr.rel (%p442) target = $region24
        $region23: #{_decoder_forward_impl.1} parent=11 // pred_region
          _
        $region24: #{_decoder_forward_impl.1} parent=11 // pred_fallthru
          _
        // Predicated region
        $region25: #{_decoder_forward_impl.1} parent=11 // pred_check
          %p445 = pneg %p133
        $region26: #{_decoder_forward_impl.1} parent=11 // pred_check_branch
          %447 = sbr.rel (%p445) target = $region28
        $region27: #{_decoder_forward_impl.1} parent=11 // pred_region
          _
        $region28: #{_decoder_forward_impl.1} parent=11 // pred_fallthru
          _
        // Predicated region
        $region29: #{_decoder_forward_impl.1} parent=11 // pred_check
          %p448 = pneg %p154
        $region30: #{_decoder_forward_impl.1} parent=11 // pred_check_branch
          %450 = sbr.rel (%p448) target = $region32
        $region31: #{_decoder_forward_impl.1} parent=11 // pred_region
          _
        $region32: #{_decoder_forward_impl.1} parent=11 // pred_fallthru
          _
        // Predicated region
        $region33: #{_decoder_forward_impl.1} parent=11 // pred_check
          %p451 = pneg %p175
        $region34: #{_decoder_forward_impl.1} parent=11 // pred_check_branch
          %453 = sbr.rel (%p451) target = $region36
        $region35: #{_decoder_forward_impl.1} parent=11 // pred_region
          _
        $region36: #{_decoder_forward_impl.1} parent=11 // pred_fallthru
          _
        // Predicated region
        $region37: #{_decoder_forward_impl.1} parent=11 // pred_check
          %p454 = pneg %p196
        $region38: #{_decoder_forward_impl.1} parent=11 // pred_check_branch
          %456 = sbr.rel (%p454) target = $region40
        $region39: #{_decoder_forward_impl.1} parent=11 // pred_region
          _
        $region40: #{_decoder_forward_impl.1} parent=11 // pred_fallthru
          _
        // Predicated region
        $region41: #{_decoder_forward_impl.1} parent=11 // pred_check
          %p457 = pneg %p217
        $region42: #{_decoder_forward_impl.1} parent=11 // pred_check_branch
          %459 = sbr.rel (%p457) target = $region44
        $region43: #{_decoder_forward_impl.1} parent=11 // pred_region
          _
        $region44: #{_decoder_forward_impl.1} parent=11 // pred_fallthru
          _
        // Predicated region
        $region45: #{_decoder_forward_impl.1} parent=11 // pred_check
          %p460 = pneg %p238
        $region46: #{_decoder_forward_impl.1} parent=11 // pred_check_branch
          %462 = sbr.rel (%p460) target = $region48
        $region47: #{_decoder_forward_impl.1} parent=11 // pred_region
          _
        $region48: #{_decoder_forward_impl.1} parent=11 // pred_fallthru
          _
        // Predicated region
        $region49: #{_decoder_forward_impl.1} parent=11 // pred_check
          %p463 = pneg %p311
        $region50: #{_decoder_forward_impl.1} parent=11 // pred_check_branch
          %465 = sbr.rel (%p463) target = $region52
        $region51: #{_decoder_forward_impl.1} parent=11 // pred_region
          _
        $region52: #{_decoder_forward_impl.1} parent=11 // pred_fallthru
          _
        // Predicated region
        $region53: #{_decoder_forward_impl.1} parent=11 // pred_check
          %p466 = pneg %p332
        $region54: #{_decoder_forward_impl.1} parent=11 // pred_check_branch
          %468 = sbr.rel (%p466) target = $region56
        $region55: #{_decoder_forward_impl.1} parent=11 // pred_region
          _
        $region56: #{_decoder_forward_impl.1} parent=11 // pred_fallthru
          _
        // Predicated region
        $region57: #{_decoder_forward_impl.1} parent=11 // pred_check
          %p469 = pneg %p353
        $region58: #{_decoder_forward_impl.1} parent=11 // pred_check_branch
          %471 = sbr.rel (%p469) target = $region60
        $region59: #{_decoder_forward_impl.1} parent=11 // pred_region
          _
        $region60: #{_decoder_forward_impl.1} parent=11 // pred_fallthru
          _
        // Predicated region
        $region61: #{_decoder_forward_impl.1} parent=11 // pred_check
          %p472 = pneg %p374
        $region62: #{_decoder_forward_impl.1} parent=11 // pred_check_branch
          %474 = sbr.rel (%p472) target = $region64
        $region63: #{_decoder_forward_impl.1} parent=11 // pred_region
          _
        $region64: #{_decoder_forward_impl.1} parent=11 // pred_fallthru
          _
      $region12: #{_decoder_forward_impl.1} parent=5 // pred_fallthru
        _
      %p475 = scmp.lt.s32.totalorder %s37, 8
      // Predicated region
      $region65: #{_decoder_forward_impl.1} parent=5 // pred_check
        %p476 = pneg %p475
      $region66: #{_decoder_forward_impl.1} parent=5 // pred_check_branch
        %478 = sbr.rel (%p476) target = $region68
      $region67: #{_decoder_forward_impl.1} parent=5 // pred_region
        // Predicated region
        $region69: #{_decoder_forward_impl.1} parent=67 // pred_check
          %p479 = pneg %p258
        $region70: #{_decoder_forward_impl.1} parent=67 // pred_check_branch
          %481 = sbr.rel (%p479) target = $region72
        $region71: #{_decoder_forward_impl.1} parent=67 // pred_region
          %s482 = sand.u32 %s248, 1
          %s483 = sand.u32 %s248, 1
          %s484 = smul.addr %s483, 16
          %s485 = scalar_lea.vmem [#allocation8], %s484
          %s486 = smul.addr %s45, 8
          %s487 = scalar_lea.vmem %s10, %s486
          // Predicated region
          $region73: #{_decoder_forward_impl.1} parent=71 // pred_check
            _
          $region74: #{_decoder_forward_impl.1} parent=71 // pred_check_branch
            %489 = sbr.rel (0) target = $region76
          $region75: #{_decoder_forward_impl.1} parent=71 // pred_region
            // Predicated region
            $region77: #{_decoder_forward_impl.1} parent=75 // pred_check
              _
            $region78: #{_decoder_forward_impl.1} parent=75 // pred_check_branch
              %491 = sbr.rel (0) target = $region80
            $region79: #{_decoder_forward_impl.1} parent=75 // pred_region
              // Predicated region
              $region92: #{_decoder_forward_impl.1} parent=79 // pred_check
                _
              $region93: #{_decoder_forward_impl.1} parent=79 // pred_check_branch
                %509 = sbr.rel (0) target = $region95
              $region94: #{_decoder_forward_impl.1} parent=79 // pred_region
                loop: start=0, step=1, limit=1
                $region96: #{_decoder_forward_impl.1} parent=94 // loop_pre_header
                  _
                $region97: #{_decoder_forward_impl.1} parent=94 // loop_header
                  %s511 = sphi 0, %s515
                  %p512 = scmp.ge.s32.totalorder %s511, 1
                  %s516 = sphi %s487, %s487
                  %s517 = sphi %s485, %s485
                $region98: #{_decoder_forward_impl.1} parent=94 // loop_header_branch
                  %514 = sbr.rel (%p512) target = $region102
                $region99: #{_decoder_forward_impl.1} parent=94 // loop_body
                  %v518 = vld [vmem:[%s516] sm:$0xff]
                  %519 = vst [vmem:[%s517] sm:$0xff] %v518
                  %v520 = vld [vmem:[%s516 + $0x20] sm:$0xff]
                  %521 = vst [vmem:[%s517 + $0x8] sm:$0xff] %v520
                $region100: #{_decoder_forward_impl.1} parent=94 // loop_footer
                  %s515 = sadd.s32 1, %s511
                $region101: #{_decoder_forward_impl.1} parent=94 // loop_footer_branch
                  %510 = sbr.rel target = $region97
                $region102: #{_decoder_forward_impl.1} parent=94 // loop_exit
                  _
              $region95: #{_decoder_forward_impl.1} parent=79 // pred_fallthru
                _
              // Predicated region
              $region103: #{_decoder_forward_impl.1} parent=79 // pred_check
                _
              $region104: #{_decoder_forward_impl.1} parent=79 // pred_check_branch
                %523 = sbr.rel target = $region106
              $region105: #{_decoder_forward_impl.1} parent=79 // pred_region
                _
              $region106: #{_decoder_forward_impl.1} parent=79 // pred_fallthru
                _
            $region80: #{_decoder_forward_impl.1} parent=75 // pred_fallthru
              _
            // Predicated region
            $region81: #{_decoder_forward_impl.1} parent=75 // pred_check
              _
            $region82: #{_decoder_forward_impl.1} parent=75 // pred_check_branch
              %493 = sbr.rel target = $region84
            $region83: #{_decoder_forward_impl.1} parent=75 // pred_region
              %s495 = ssub.s32 256, 1
              loop: start=0, step=1, limit=1
              $region85: #{_decoder_forward_impl.1} parent=83 // loop_pre_header
                _
              $region86: #{_decoder_forward_impl.1} parent=83 // loop_header
                %s497 = sphi 0, %s501
                %p498 = scmp.ge.s32.totalorder %s497, 1
                %s502 = sphi %s487, %s487
                %s503 = sphi %s485, %s485
              $region87: #{_decoder_forward_impl.1} parent=83 // loop_header_branch
                %500 = sbr.rel (%p498) target = $region91
              $region88: #{_decoder_forward_impl.1} parent=83 // loop_body
                %v504 = vld [vmem:[%s502] sm:%s495]
                %505 = vst [vmem:[%s503] sm:%s495] %v504
                %v506 = vld [vmem:[%s502 + $0x20] sm:%s495]
                %507 = vst [vmem:[%s503 + $0x8] sm:%s495] %v506
              $region89: #{_decoder_forward_impl.1} parent=83 // loop_footer
                %s501 = sadd.s32 1, %s497
              $region90: #{_decoder_forward_impl.1} parent=83 // loop_footer_branch
                %496 = sbr.rel target = $region86
              $region91: #{_decoder_forward_impl.1} parent=83 // loop_exit
                _
            $region84: #{_decoder_forward_impl.1} parent=75 // pred_fallthru
              _
          $region76: #{_decoder_forward_impl.1} parent=71 // pred_fallthru
            _
          %524 = vnop
        $region72: #{_decoder_forward_impl.1} parent=67 // pred_fallthru
          _
        // Predicated region
        $region107: #{_decoder_forward_impl.1} parent=67 // pred_check
          %p525 = pneg %p284
        $region108: #{_decoder_forward_impl.1} parent=67 // pred_check_branch
          %527 = sbr.rel (%p525) target = $region110
        $region109: #{_decoder_forward_impl.1} parent=67 // pred_region
          %p528 = scmp.lt.s32.totalorder %s45, 3
          %s529 = scalar_select %p528, %s45, 3
          %s530 = scalar_lea.vmem %s11, %s529
        $region110: #{_decoder_forward_impl.1} parent=67 // pred_fallthru
          _
      $region68: #{_decoder_forward_impl.1} parent=5 // pred_fallthru
        _
      %p531 = scmp.le.s32.totalorder 1, %s37
      %p532 = scmp.lt.s32.totalorder %s37, 9
      %p533 = pnand %p531, %p532
      %p534 = pneg %p533
      // Predicated region
      $region111: #{_decoder_forward_impl.1} parent=5 // pred_check
        _
      $region112: #{_decoder_forward_impl.1} parent=5 // pred_check_branch
        %536 = sbr.rel (%p533) target = $region114
      $region113: #{_decoder_forward_impl.1} parent=5 // pred_region
        %s537 = ssub.s32 %s37, 1
        %s538 = sand.u32 %s251, 1
        %s539 = sand.u32 %s251, 1
        %s540 = smul.addr %s539, 16
        %s541 = scalar_lea.vmem [#allocation8], %s540
        // Predicated region
        $region115: #{_decoder_forward_impl.1} parent=113 // pred_check
          %p542 = pneg %p264
        $region116: #{_decoder_forward_impl.1} parent=113 // pred_check_branch
          %544 = sbr.rel (%p542) target = $region118
        $region117: #{_decoder_forward_impl.1} parent=113 // pred_region
          _
        $region118: #{_decoder_forward_impl.1} parent=113 // pred_fallthru
          _
        %p545 = pneg %p70
        %p546 = pneg %p67
        %p547 = pneg %p91
        %p548 = pneg %p88
        %p549 = pneg %p112
        %p550 = pneg %p109
        %p551 = pneg %p133
        %p552 = pneg %p130
        %p553 = pneg %p154
        %p554 = pneg %p151
        %p555 = pneg %p175
        %p556 = pneg %p172
        %p557 = pneg %p196
        %p558 = pneg %p193
        %p559 = pneg %p217
        %p560 = pneg %p214
        %p561 = pneg %p238
        %p562 = pneg %p235
        %s563 = sand.u32 %s251, 1
        %s564 = sand.u32 %s251, 1
        %s565 = smul.addr %s564, 16
        %s566 = scalar_lea.vmem [#allocation8], %s565
        %p567 = pneg %p264
        %p568 = pneg %p261
        %p569 = scmp.lt.s32.totalorder %s47, 3
        %s570 = scalar_select %p569, %s47, 3
        %s571 = scalar_lea.vmem %s11, %s570
        %p572 = pneg %p290
        %p573 = pneg %p287
        %p574 = pneg %p311
        %p575 = pneg %p308
        %p576 = pneg %p332
        %p577 = pneg %p329
        %p578 = pneg %p353
        %p579 = pneg %p350
        %p580 = pneg %p374
        %p581 = pneg %p371
        %p582 = pneg %p400
        %p583 = pneg %p397
        %s584 = sand.u32 %s387, 1
        %s585 = scalar_lea.sflag [#allocation10], %s584
        %s586 = sand.u32 %s387, 1
        %s587 = smul.addr %s586, 2
        %s588 = scalar_lea.vmem [#allocation9], %s587
        %p589 = pneg %p421
        %p590 = pneg %p418
        %p591 = scmp.lt.s32.totalorder %s47, 3
        %s592 = scalar_select %p591, %s47, 3
        %s593 = scalar_lea.vmem %s11, %s592
        %p594 = scmp.eq.s32.totalorder %s46, 0
        %p595 = scmp.eq.s32.totalorder %s47, 0
        %p596 = pnand %p594, %p595
        %p597 = pneg %p596
        // Predicated region
        $region119: #{_decoder_forward_impl.1} parent=113 // pred_check
          _
        $region120: #{_decoder_forward_impl.1} parent=113 // pred_check_branch
          %599 = sbr.rel (%p596) target = $region122
        $region121: #{_decoder_forward_impl.1} parent=113 // pred_region
          %v600 = vld [vmem:[%s2] sm:$0x3]
          %v601 = vld [vmem:[%s3] sm:$0x3]
          %v602 = vld [vmem:[%s4] sm:$0x3]
          %v603 = vld [vmem:[%s5] sm:$0xff]
          %v604 = vld [vmem:[%s5 + $0x8] sm:$0xff]
          %v605 = vld [vmem:[%s5 + $0x10] sm:$0xff]
          %v606 = vld [vmem:[%s5 + $0x18] sm:$0xff]
          %v607 = vld [vmem:[%s5 + $0x20] sm:$0xff]
          %v608 = vld [vmem:[%s5 + $0x28] sm:$0xff]
          %v609 = vld [vmem:[%s5 + $0x30] sm:$0xff]
          %v610 = vld [vmem:[%s5 + $0x38] sm:$0xff]
          %s611 = sld [smem:[#allocation6]]
          %s612 = scalar_lea.vmem %s1, %s611
          %v613 = vld [vmem:[%s612] sm:$0x1]
          %s614 = sld [smem:[#allocation6 + $0x1]]
          %s615 = scalar_lea.vmem %s1, %s614
          %v616 = vld [vmem:[%s615] sm:$0x1]
          %v618 = vrot.slane %v616, 7
          %vm620 = vcmask 1040384
          %v621 = vsel %vm620, %v613, %v618
          %623 = vrot.lane.b32.xlu0 %v600, 32
          %v624 = vpop.permute.xlu0 %623
          %vm626 = vcmask 261120
          %v627 = vsel %vm626, %v621, %v624
          %v628 = vld [vmem:[%s6] sm:$0x1]
          %v630 = vperm.slane %v628, 0
          %vm632 = vcmask 523264
          %v634 = vsel %vm632, %v627, 0
          %636 = vmatpush.msra.mxu0 0.0
          %637 = vmatpush.msra.mxu0 0.0
          %638 = vmatpush.msra.mxu0 0.0
          %639 = vmatpush.msra.mxu0 0.0
          %640 = vmatpush.msra.mxu0 0.0
          %641 = vmatpush.msra.mxu0 0.0
          %642 = vmatpush.msra.mxu0 0.0
          %643 = vmatpush.msra.mxu0 0.0
          %v644 = vand.u32 %v610, 4294901760
          %645 = vmatpush.msra.mxu0 %v644
          %v646 = vand.u32 %v609, 4294901760
          %647 = vmatpush.msra.mxu0 %v646
          %v648 = vand.u32 %v608, 4294901760
          %649 = vmatpush.msra.mxu0 %v648
          %v650 = vand.u32 %v607, 4294901760
          %651 = vmatpush.msra.mxu0 %v650
          %v652 = vand.u32 %v606, 4294901760
          %653 = vmatpush.msra.mxu0 %v652
          %v654 = vand.u32 %v605, 4294901760
          %655 = vmatpush.msra.mxu0 %v654
          %v656 = vand.u32 %v604, 4294901760
          %657 = vmatpush.msra.mxu0 %v656
          %v658 = vand.u32 %v603, 4294901760
          %659 = vmatpush.msra.mxu0 %v658
          %v660 = vand.u32 %v634, 4294901760
          %v661 = vsub.f32 %v634, %v660
          %v662 = vand.u32 %v661, 4294901760
          %v663 = vsub.f32 %v661, %v662
          %v664 = vand.u32 %v663, 4294901760
          %665 = vmatmul.f32.gmra.mxu0 %v664
          %v666 = vpop.f32.mrf.mxu0
          %v667 = vadd.f32 %v630, %v666
          %668 = vdwg.mxu0
          %669 = vmatpush.msra.mxu0 0.0
          %670 = vmatpush.msra.mxu0 0.0
          %671 = vmatpush.msra.mxu0 0.0
          %672 = vmatpush.msra.mxu0 0.0
          %673 = vmatpush.msra.mxu0 0.0
          %674 = vmatpush.msra.mxu0 0.0
          %675 = vmatpush.msra.mxu0 0.0
          %676 = vmatpush.msra.mxu0 0.0
          %v677 = vand.u32 %v610, 4294901760
          %v678 = vsub.f32 %v610, %v677
          %v679 = vand.u32 %v678, 4294901760
          %v680 = vsub.f32 %v678, %v679
          %v681 = vand.u32 %v680, 4294901760
          %682 = vmatpush.msra.mxu0 %v681
          %v683 = vand.u32 %v609, 4294901760
          %v684 = vsub.f32 %v609, %v683
          %v685 = vand.u32 %v684, 4294901760
          %v686 = vsub.f32 %v684, %v685
          %v687 = vand.u32 %v686, 4294901760
          %688 = vmatpush.msra.mxu0 %v687
          %v689 = vand.u32 %v608, 4294901760
          %v690 = vsub.f32 %v608, %v689
          %v691 = vand.u32 %v690, 4294901760
          %v692 = vsub.f32 %v690, %v691
          %v693 = vand.u32 %v692, 4294901760
          %694 = vmatpush.msra.mxu0 %v693
          %v695 = vand.u32 %v607, 4294901760
          %v696 = vsub.f32 %v607, %v695
          %v697 = vand.u32 %v696, 4294901760
          %v698 = vsub.f32 %v696, %v697
          %v699 = vand.u32 %v698, 4294901760
          %700 = vmatpush.msra.mxu0 %v699
          %v701 = vand.u32 %v606, 4294901760
          %v702 = vsub.f32 %v606, %v701
          %v703 = vand.u32 %v702, 4294901760
          %v704 = vsub.f32 %v702, %v703
          %v705 = vand.u32 %v704, 4294901760
          %706 = vmatpush.msra.mxu0 %v705
          %v707 = vand.u32 %v605, 4294901760
          %v708 = vsub.f32 %v605, %v707
          %v709 = vand.u32 %v708, 4294901760
          %v710 = vsub.f32 %v708, %v709
          %v711 = vand.u32 %v710, 4294901760
          %712 = vmatpush.msra.mxu0 %v711
          %v713 = vand.u32 %v604, 4294901760
          %v714 = vsub.f32 %v604, %v713
          %v715 = vand.u32 %v714, 4294901760
          %v716 = vsub.f32 %v714, %v715
          %v717 = vand.u32 %v716, 4294901760
          %718 = vmatpush.msra.mxu0 %v717
          %v719 = vand.u32 %v603, 4294901760
          %v720 = vsub.f32 %v603, %v719
          %v721 = vand.u32 %v720, 4294901760
          %v722 = vsub.f32 %v720, %v721
          %v723 = vand.u32 %v722, 4294901760
          %724 = vmatpush.msra.mxu0 %v723
          %v725 = vand.u32 %v634, 4294901760
          %726 = vmatmul.f32.gmra.mxu0 %v725
          %v727 = vpop.f32.mrf.mxu0
          %v728 = vadd.f32 %v667, %v727
          %729 = vdwg.mxu0
          %730 = vmatpush.msra.mxu0 0.0
          %731 = vmatpush.msra.mxu0 0.0
          %732 = vmatpush.msra.mxu0 0.0
          %733 = vmatpush.msra.mxu0 0.0
          %734 = vmatpush.msra.mxu0 0.0
          %735 = vmatpush.msra.mxu0 0.0
          %736 = vmatpush.msra.mxu0 0.0
          %737 = vmatpush.msra.mxu0 0.0
          %v738 = vand.u32 %v610, 4294901760
          %v739 = vsub.f32 %v610, %v738
          %740 = vmatpush.msra.mxu0 %v739
          %v741 = vand.u32 %v609, 4294901760
          %v742 = vsub.f32 %v609, %v741
          %743 = vmatpush.msra.mxu0 %v742
          %v744 = vand.u32 %v608, 4294901760
          %v745 = vsub.f32 %v608, %v744
          %746 = vmatpush.msra.mxu0 %v745
          %v747 = vand.u32 %v607, 4294901760
          %v748 = vsub.f32 %v607, %v747
          %749 = vmatpush.msra.mxu0 %v748
          %v750 = vand.u32 %v606, 4294901760
          %v751 = vsub.f32 %v606, %v750
          %752 = vmatpush.msra.mxu0 %v751
          %v753 = vand.u32 %v605, 4294901760
          %v754 = vsub.f32 %v605, %v753
          %755 = vmatpush.msra.mxu0 %v754
          %v756 = vand.u32 %v604, 4294901760
          %v757 = vsub.f32 %v604, %v756
          %758 = vmatpush.msra.mxu0 %v757
          %v759 = vand.u32 %v603, 4294901760
          %v760 = vsub.f32 %v603, %v759
          %761 = vmatpush.msra.mxu0 %v760
          %v762 = vand.u32 %v634, 4294901760
          %v763 = vsub.f32 %v634, %v762
          %764 = vmatmul.f32.gmra.mxu0 %v763
          %v765 = vpop.f32.mrf.mxu0
          %v766 = vadd.f32 %v728, %v765
          %767 = vdwg.mxu0
          %768 = vmatpush.msra.mxu0 0.0
          %769 = vmatpush.msra.mxu0 0.0
          %770 = vmatpush.msra.mxu0 0.0
          %771 = vmatpush.msra.mxu0 0.0
          %772 = vmatpush.msra.mxu0 0.0
          %773 = vmatpush.msra.mxu0 0.0
          %774 = vmatpush.msra.mxu0 0.0
          %775 = vmatpush.msra.mxu0 0.0
          %v776 = vand.u32 %v610, 4294901760
          %777 = vmatpush.msra.mxu0 %v776
          %v778 = vand.u32 %v609, 4294901760
          %779 = vmatpush.msra.mxu0 %v778
          %v780 = vand.u32 %v608, 4294901760
          %781 = vmatpush.msra.mxu0 %v780
          %v782 = vand.u32 %v607, 4294901760
          %783 = vmatpush.msra.mxu0 %v782
          %v784 = vand.u32 %v606, 4294901760
          %785 = vmatpush.msra.mxu0 %v784
          %v786 = vand.u32 %v605, 4294901760
          %787 = vmatpush.msra.mxu0 %v786
          %v788 = vand.u32 %v604, 4294901760
          %789 = vmatpush.msra.mxu0 %v788
          %v790 = vand.u32 %v603, 4294901760
          %791 = vmatpush.msra.mxu0 %v790
          %v792 = vand.u32 %v634, 4294901760
          %v793 = vsub.f32 %v634, %v792
          %v794 = vand.u32 %v793, 4294901760
          %795 = vmatmul.f32.gmra.mxu0 %v794
          %v796 = vpop.f32.mrf.mxu0
          %v797 = vadd.f32 %v766, %v796
          %798 = vdwg.mxu0
          %799 = vmatpush.msra.mxu0 0.0
          %800 = vmatpush.msra.mxu0 0.0
          %801 = vmatpush.msra.mxu0 0.0
          %802 = vmatpush.msra.mxu0 0.0
          %803 = vmatpush.msra.mxu0 0.0
          %804 = vmatpush.msra.mxu0 0.0
          %805 = vmatpush.msra.mxu0 0.0
          %806 = vmatpush.msra.mxu0 0.0
          %v807 = vand.u32 %v610, 4294901760
          %v808 = vsub.f32 %v610, %v807
          %v809 = vand.u32 %v808, 4294901760
          %810 = vmatpush.msra.mxu0 %v809
          %v811 = vand.u32 %v609, 4294901760
          %v812 = vsub.f32 %v609, %v811
          %v813 = vand.u32 %v812, 4294901760
          %814 = vmatpush.msra.mxu0 %v813
          %v815 = vand.u32 %v608, 4294901760
          %v816 = vsub.f32 %v608, %v815
          %v817 = vand.u32 %v816, 4294901760
          %818 = vmatpush.msra.mxu0 %v817
          %v819 = vand.u32 %v607, 4294901760
          %v820 = vsub.f32 %v607, %v819
          %v821 = vand.u32 %v820, 4294901760
          %822 = vmatpush.msra.mxu0 %v821
          %v823 = vand.u32 %v606, 4294901760
          %v824 = vsub.f32 %v606, %v823
          %v825 = vand.u32 %v824, 4294901760
          %826 = vmatpush.msra.mxu0 %v825
          %v827 = vand.u32 %v605, 4294901760
          %v828 = vsub.f32 %v605, %v827
          %v829 = vand.u32 %v828, 4294901760
          %830 = vmatpush.msra.mxu0 %v829
          %v831 = vand.u32 %v604, 4294901760
          %v832 = vsub.f32 %v604, %v831
          %v833 = vand.u32 %v832, 4294901760
          %834 = vmatpush.msra.mxu0 %v833
          %v835 = vand.u32 %v603, 4294901760
          %v836 = vsub.f32 %v603, %v835
          %v837 = vand.u32 %v836, 4294901760
          %838 = vmatpush.msra.mxu0 %v837
          %v839 = vand.u32 %v634, 4294901760
          %840 = vmatmul.f32.gmra.mxu0 %v839
          %v841 = vpop.f32.mrf.mxu0
          %v842 = vadd.f32 %v797, %v841
          %843 = vdwg.mxu0
          %844 = vmatpush.msra.mxu0 0.0
          %845 = vmatpush.msra.mxu0 0.0
          %846 = vmatpush.msra.mxu0 0.0
          %847 = vmatpush.msra.mxu0 0.0
          %848 = vmatpush.msra.mxu0 0.0
          %849 = vmatpush.msra.mxu0 0.0
          %850 = vmatpush.msra.mxu0 0.0
          %851 = vmatpush.msra.mxu0 0.0
          %v852 = vand.u32 %v610, 4294901760
          %853 = vmatpush.msra.mxu0 %v852
          %v854 = vand.u32 %v609, 4294901760
          %855 = vmatpush.msra.mxu0 %v854
          %v856 = vand.u32 %v608, 4294901760
          %857 = vmatpush.msra.mxu0 %v856
          %v858 = vand.u32 %v607, 4294901760
          %859 = vmatpush.msra.mxu0 %v858
          %v860 = vand.u32 %v606, 4294901760
          %861 = vmatpush.msra.mxu0 %v860
          %v862 = vand.u32 %v605, 4294901760
          %863 = vmatpush.msra.mxu0 %v862
          %v864 = vand.u32 %v604, 4294901760
          %865 = vmatpush.msra.mxu0 %v864
          %v866 = vand.u32 %v603, 4294901760
          %867 = vmatpush.msra.mxu0 %v866
          %v868 = vand.u32 %v634, 4294901760
          %869 = vmatmul.f32.gmra.mxu0 %v868
          %v870 = vpop.f32.mrf.mxu0
          %v871 = vadd.f32 %v842, %v870
          %872 = vdwg.mxu0
          %v873 = vand.u32 2147483647, %v871
          %v874 = vsub.f32 0.0, %v873
          %v875 = vmul.f32 %v874, 1.442695
          %v876 = vpow.pop %v875
          %v877 = vadd.f32 %v876, 1.0
          %v878 = vrcp.pop %v877
          %v879 = vmul.f32 %v877, %v878
          %v880 = vsub.f32 1.0, %v879
          %v881 = vmul.f32 %v878, %v880
          %v882 = vadd.f32 %v878, %v881
          %vm883 = vweird.f32 %v877
          %vm884 = vweird.f32 %v878
          %vm885 = vmor %vm883, %vm884
          %v886 = vsel %vm885, %v878, %v882
          %v887 = vand.u32 2147483647, %v877
          %vm888 = vcmp.eq.f32.partialorder %v887, 8.507059e+37
          %v889 = vand.u32 %v877, 2147483648
          %v890 = vor.u32 1.1754944e-38, %v889
          %v891 = vsel %vm888, %v890, %v886
          %v892 = vmul.f32 1.0, %v891
          %vm893 = vcmp.ge.f32.partialorder %v871, 0.0
          %v894 = vsub.f32 1.0, %v892
          %v895 = vsel %vm893, %v892, %v894
          %v896 = vtanh.pop %v871
          %898 = vrot.lane.b32.xlu0 %v601, 32
          %v899 = vpop.permute.xlu0 %898
          %v901 = vmul.f32 %v895, %v899
          %903 = vrot.lane.b32.xlu0 %v896, 64
          %v904 = vpop.permute.xlu0 %903
          %v906 = vmul.f32 %v895, %v904
          %908 = vrot.lane.b32.xlu0 %v906, 32
          %v909 = vpop.permute.xlu0 %908
          %v911 = vadd.f32 %v901, %v909
          %v912 = vtanh.pop %v911
          %914 = vrot.lane.b32.xlu0 %v912, 64
          %v915 = vpop.permute.xlu0 %914
          %v917 = vmul.f32 %v895, %v915
          %v918 = vld [vmem:[%s7] sm:$0xff]
          %v919 = vld [vmem:[%s7 + $0x8] sm:$0xff]
          %v920 = vld [vmem:[%s7 + $0x10] sm:$0xff]
          %v921 = vld [vmem:[%s7 + $0x18] sm:$0xff]
          %v922 = vld [vmem:[%s8] sm:$0xff]
          %v923 = vld [vmem:[%s8 + $0x8] sm:$0xff]
          %v924 = vld [vmem:[%s8 + $0x10] sm:$0xff]
          %v925 = vld [vmem:[%s8 + $0x18] sm:$0xff]
          %v927 = vsel %vm626, %v602, 0
          %929 = vmatpush.msra.mxu0 0.0
          %930 = vmatpush.msra.mxu0 0.0
          %931 = vmatpush.msra.mxu0 0.0
          %932 = vmatpush.msra.mxu0 0.0
          %933 = vmatpush.msra.mxu0 0.0
          %934 = vmatpush.msra.mxu0 0.0
          %935 = vmatpush.msra.mxu0 0.0
          %936 = vmatpush.msra.mxu0 0.0
          %937 = vmatpush.msra.mxu0 0.0
          %938 = vmatpush.msra.mxu0 0.0
          %939 = vmatpush.msra.mxu0 0.0
          %940 = vmatpush.msra.mxu0 0.0
          %v941 = vand.u32 %v925, 4294901760
          %942 = vmatpush.msra.mxu0 %v941
          %v943 = vand.u32 %v924, 4294901760
          %944 = vmatpush.msra.mxu0 %v943
          %v945 = vand.u32 %v923, 4294901760
          %946 = vmatpush.msra.mxu0 %v945
          %v947 = vand.u32 %v922, 4294901760
          %948 = vmatpush.msra.mxu0 %v947
          %v949 = vand.u32 %v927, 4294901760
          %v950 = vsub.f32 %v927, %v949
          %v951 = vand.u32 %v950, 4294901760
          %v952 = vsub.f32 %v950, %v951
          %v953 = vand.u32 %v952, 4294901760
          %954 = vmatmul.f32.gmra.mxu0 %v953
          %v955 = vpop.f32.mrf.mxu0
          %v956 = vadd.f32 0.0, %v955
          %957 = vdwg.mxu0
          %958 = vmatpush.msra.mxu0 0.0
          %959 = vmatpush.msra.mxu0 0.0
          %960 = vmatpush.msra.mxu0 0.0
          %961 = vmatpush.msra.mxu0 0.0
          %962 = vmatpush.msra.mxu0 0.0
          %963 = vmatpush.msra.mxu0 0.0
          %964 = vmatpush.msra.mxu0 0.0
          %965 = vmatpush.msra.mxu0 0.0
          %966 = vmatpush.msra.mxu0 0.0
          %967 = vmatpush.msra.mxu0 0.0
          %968 = vmatpush.msra.mxu0 0.0
          %969 = vmatpush.msra.mxu0 0.0
          %v970 = vand.u32 %v925, 4294901760
          %v971 = vsub.f32 %v925, %v970
          %v972 = vand.u32 %v971, 4294901760
          %v973 = vsub.f32 %v971, %v972
          %v974 = vand.u32 %v973, 4294901760
          %975 = vmatpush.msra.mxu0 %v974
          %v976 = vand.u32 %v924, 4294901760
          %v977 = vsub.f32 %v924, %v976
          %v978 = vand.u32 %v977, 4294901760
          %v979 = vsub.f32 %v977, %v978
          %v980 = vand.u32 %v979, 4294901760
          %981 = vmatpush.msra.mxu0 %v980
          %v982 = vand.u32 %v923, 4294901760
          %v983 = vsub.f32 %v923, %v982
          %v984 = vand.u32 %v983, 4294901760
          %v985 = vsub.f32 %v983, %v984
          %v986 = vand.u32 %v985, 4294901760
          %987 = vmatpush.msra.mxu0 %v986
          %v988 = vand.u32 %v922, 4294901760
          %v989 = vsub.f32 %v922, %v988
          %v990 = vand.u32 %v989, 4294901760
          %v991 = vsub.f32 %v989, %v990
          %v992 = vand.u32 %v991, 4294901760
          %993 = vmatpush.msra.mxu0 %v992
          %v994 = vand.u32 %v927, 4294901760
          %995 = vmatmul.f32.gmra.mxu0 %v994
          %v996 = vpop.f32.mrf.mxu0
          %v997 = vadd.f32 %v956, %v996
          %998 = vdwg.mxu0
          %999 = vmatpush.msra.mxu0 0.0
          %1000 = vmatpush.msra.mxu0 0.0
          %1001 = vmatpush.msra.mxu0 0.0
          %1002 = vmatpush.msra.mxu0 0.0
          %1003 = vmatpush.msra.mxu0 0.0
          %1004 = vmatpush.msra.mxu0 0.0
          %1005 = vmatpush.msra.mxu0 0.0
          %1006 = vmatpush.msra.mxu0 0.0
          %1007 = vmatpush.msra.mxu0 0.0
          %1008 = vmatpush.msra.mxu0 0.0
          %1009 = vmatpush.msra.mxu0 0.0
          %1010 = vmatpush.msra.mxu0 0.0
          %v1011 = vand.u32 %v925, 4294901760
          %v1012 = vsub.f32 %v925, %v1011
          %1013 = vmatpush.msra.mxu0 %v1012
          %v1014 = vand.u32 %v924, 4294901760
          %v1015 = vsub.f32 %v924, %v1014
          %1016 = vmatpush.msra.mxu0 %v1015
          %v1017 = vand.u32 %v923, 4294901760
          %v1018 = vsub.f32 %v923, %v1017
          %1019 = vmatpush.msra.mxu0 %v1018
          %v1020 = vand.u32 %v922, 4294901760
          %v1021 = vsub.f32 %v922, %v1020
          %1022 = vmatpush.msra.mxu0 %v1021
          %v1023 = vand.u32 %v927, 4294901760
          %v1024 = vsub.f32 %v927, %v1023
          %1025 = vmatmul.f32.gmra.mxu0 %v1024
          %v1026 = vpop.f32.mrf.mxu0
          %v1027 = vadd.f32 %v997, %v1026
          %1028 = vdwg.mxu0
          %1029 = vmatpush.msra.mxu0 0.0
          %1030 = vmatpush.msra.mxu0 0.0
          %1031 = vmatpush.msra.mxu0 0.0
          %1032 = vmatpush.msra.mxu0 0.0
          %1033 = vmatpush.msra.mxu0 0.0
          %1034 = vmatpush.msra.mxu0 0.0
          %1035 = vmatpush.msra.mxu0 0.0
          %1036 = vmatpush.msra.mxu0 0.0
          %1037 = vmatpush.msra.mxu0 0.0
          %1038 = vmatpush.msra.mxu0 0.0
          %1039 = vmatpush.msra.mxu0 0.0
          %1040 = vmatpush.msra.mxu0 0.0
          %v1041 = vand.u32 %v925, 4294901760
          %1042 = vmatpush.msra.mxu0 %v1041
          %v1043 = vand.u32 %v924, 4294901760
          %1044 = vmatpush.msra.mxu0 %v1043
          %v1045 = vand.u32 %v923, 4294901760
          %1046 = vmatpush.msra.mxu0 %v1045
          %v1047 = vand.u32 %v922, 4294901760
          %1048 = vmatpush.msra.mxu0 %v1047
          %v1049 = vand.u32 %v927, 4294901760
          %v1050 = vsub.f32 %v927, %v1049
          %v1051 = vand.u32 %v1050, 4294901760
          %1052 = vmatmul.f32.gmra.mxu0 %v1051
          %v1053 = vpop.f32.mrf.mxu0
          %v1054 = vadd.f32 %v1027, %v1053
          %1055 = vdwg.mxu0
          %1056 = vmatpush.msra.mxu0 0.0
          %1057 = vmatpush.msra.mxu0 0.0
          %1058 = vmatpush.msra.mxu0 0.0
          %1059 = vmatpush.msra.mxu0 0.0
          %1060 = vmatpush.msra.mxu0 0.0
          %1061 = vmatpush.msra.mxu0 0.0
          %1062 = vmatpush.msra.mxu0 0.0
          %1063 = vmatpush.msra.mxu0 0.0
          %1064 = vmatpush.msra.mxu0 0.0
          %1065 = vmatpush.msra.mxu0 0.0
          %1066 = vmatpush.msra.mxu0 0.0
          %1067 = vmatpush.msra.mxu0 0.0
          %v1068 = vand.u32 %v925, 4294901760
          %v1069 = vsub.f32 %v925, %v1068
          %v1070 = vand.u32 %v1069, 4294901760
          %1071 = vmatpush.msra.mxu0 %v1070
          %v1072 = vand.u32 %v924, 4294901760
          %v1073 = vsub.f32 %v924, %v1072
          %v1074 = vand.u32 %v1073, 4294901760
          %1075 = vmatpush.msra.mxu0 %v1074
          %v1076 = vand.u32 %v923, 4294901760
          %v1077 = vsub.f32 %v923, %v1076
          %v1078 = vand.u32 %v1077, 4294901760
          %1079 = vmatpush.msra.mxu0 %v1078
          %v1080 = vand.u32 %v922, 4294901760
          %v1081 = vsub.f32 %v922, %v1080
          %v1082 = vand.u32 %v1081, 4294901760
          %1083 = vmatpush.msra.mxu0 %v1082
          %v1084 = vand.u32 %v927, 4294901760
          %1085 = vmatmul.f32.gmra.mxu0 %v1084
          %v1086 = vpop.f32.mrf.mxu0
          %v1087 = vadd.f32 %v1054, %v1086
          %1088 = vdwg.mxu0
          %1089 = vmatpush.msra.mxu0 0.0
          %1090 = vmatpush.msra.mxu0 0.0
          %1091 = vmatpush.msra.mxu0 0.0
          %1092 = vmatpush.msra.mxu0 0.0
          %1093 = vmatpush.msra.mxu0 0.0
          %1094 = vmatpush.msra.mxu0 0.0
          %1095 = vmatpush.msra.mxu0 0.0
          %1096 = vmatpush.msra.mxu0 0.0
          %1097 = vmatpush.msra.mxu0 0.0
          %1098 = vmatpush.msra.mxu0 0.0
          %1099 = vmatpush.msra.mxu0 0.0
          %1100 = vmatpush.msra.mxu0 0.0
          %v1101 = vand.u32 %v925, 4294901760
          %1102 = vmatpush.msra.mxu0 %v1101
          %v1103 = vand.u32 %v924, 4294901760
          %1104 = vmatpush.msra.mxu0 %v1103
          %v1105 = vand.u32 %v923, 4294901760
          %1106 = vmatpush.msra.mxu0 %v1105
          %v1107 = vand.u32 %v922, 4294901760
          %1108 = vmatpush.msra.mxu0 %v1107
          %v1109 = vand.u32 %v927, 4294901760
          %1110 = vmatmul.f32.gmra.mxu0 %v1109
          %v1111 = vpop.f32.mrf.mxu0
          %v1112 = vadd.f32 %v1087, %v1111
          %1113 = vdwg.mxu0
          %1115 = vrot.lane.b32.xlu0 %v917, 32
          %v1116 = vpop.permute.xlu0 %1115
          %v1117 = vsel %vm626, %v1116, 0
          %1119 = vmatpush.msra.mxu0 0.0
          %1120 = vmatpush.msra.mxu0 0.0
          %1121 = vmatpush.msra.mxu0 0.0
          %1122 = vmatpush.msra.mxu0 0.0
          %1123 = vmatpush.msra.mxu0 0.0
          %1124 = vmatpush.msra.mxu0 0.0
          %1125 = vmatpush.msra.mxu0 0.0
          %1126 = vmatpush.msra.mxu0 0.0
          %1127 = vmatpush.msra.mxu0 0.0
          %1128 = vmatpush.msra.mxu0 0.0
          %1129 = vmatpush.msra.mxu0 0.0
          %1130 = vmatpush.msra.mxu0 0.0
          %v1131 = vand.u32 %v921, 4294901760
          %1132 = vmatpush.msra.mxu0 %v1131
          %v1133 = vand.u32 %v920, 4294901760
          %1134 = vmatpush.msra.mxu0 %v1133
          %v1135 = vand.u32 %v919, 4294901760
          %1136 = vmatpush.msra.mxu0 %v1135
          %v1137 = vand.u32 %v918, 4294901760
          %1138 = vmatpush.msra.mxu0 %v1137
          %v1139 = vand.u32 %v1117, 4294901760
          %v1140 = vsub.f32 %v1117, %v1139
          %v1141 = vand.u32 %v1140, 4294901760
          %v1142 = vsub.f32 %v1140, %v1141
          %v1143 = vand.u32 %v1142, 4294901760
          %1144 = vmatmul.f32.gmra.mxu0 %v1143
          %v1145 = vpop.f32.mrf.mxu0
          %v1146 = vadd.f32 %v1112, %v1145
          %1147 = vdwg.mxu0
          %1148 = vmatpush.msra.mxu0 0.0
          %1149 = vmatpush.msra.mxu0 0.0
          %1150 = vmatpush.msra.mxu0 0.0
          %1151 = vmatpush.msra.mxu0 0.0
          %1152 = vmatpush.msra.mxu0 0.0
          %1153 = vmatpush.msra.mxu0 0.0
          %1154 = vmatpush.msra.mxu0 0.0
          %1155 = vmatpush.msra.mxu0 0.0
          %1156 = vmatpush.msra.mxu0 0.0
          %1157 = vmatpush.msra.mxu0 0.0
          %1158 = vmatpush.msra.mxu0 0.0
          %1159 = vmatpush.msra.mxu0 0.0
          %v1160 = vand.u32 %v921, 4294901760
          %v1161 = vsub.f32 %v921, %v1160
          %v1162 = vand.u32 %v1161, 4294901760
          %v1163 = vsub.f32 %v1161, %v1162
          %v1164 = vand.u32 %v1163, 4294901760
          %1165 = vmatpush.msra.mxu0 %v1164
          %v1166 = vand.u32 %v920, 4294901760
          %v1167 = vsub.f32 %v920, %v1166
          %v1168 = vand.u32 %v1167, 4294901760
          %v1169 = vsub.f32 %v1167, %v1168
          %v1170 = vand.u32 %v1169, 4294901760
          %1171 = vmatpush.msra.mxu0 %v1170
          %v1172 = vand.u32 %v919, 4294901760
          %v1173 = vsub.f32 %v919, %v1172
          %v1174 = vand.u32 %v1173, 4294901760
          %v1175 = vsub.f32 %v1173, %v1174
          %v1176 = vand.u32 %v1175, 4294901760
          %1177 = vmatpush.msra.mxu0 %v1176
          %v1178 = vand.u32 %v918, 4294901760
          %v1179 = vsub.f32 %v918, %v1178
          %v1180 = vand.u32 %v1179, 4294901760
          %v1181 = vsub.f32 %v1179, %v1180
          %v1182 = vand.u32 %v1181, 4294901760
          %1183 = vmatpush.msra.mxu0 %v1182
          %v1184 = vand.u32 %v1117, 4294901760
          %1185 = vmatmul.f32.gmra.mxu0 %v1184
          %v1186 = vpop.f32.mrf.mxu0
          %v1187 = vadd.f32 %v1146, %v1186
          %1188 = vdwg.mxu0
          %1189 = vmatpush.msra.mxu0 0.0
          %1190 = vmatpush.msra.mxu0 0.0
          %1191 = vmatpush.msra.mxu0 0.0
          %1192 = vmatpush.msra.mxu0 0.0
          %1193 = vmatpush.msra.mxu0 0.0
          %1194 = vmatpush.msra.mxu0 0.0
          %1195 = vmatpush.msra.mxu0 0.0
          %1196 = vmatpush.msra.mxu0 0.0
          %1197 = vmatpush.msra.mxu0 0.0
          %1198 = vmatpush.msra.mxu0 0.0
          %1199 = vmatpush.msra.mxu0 0.0
          %1200 = vmatpush.msra.mxu0 0.0
          %v1201 = vand.u32 %v921, 4294901760
          %v1202 = vsub.f32 %v921, %v1201
          %1203 = vmatpush.msra.mxu0 %v1202
          %v1204 = vand.u32 %v920, 4294901760
          %v1205 = vsub.f32 %v920, %v1204
          %1206 = vmatpush.msra.mxu0 %v1205
          %v1207 = vand.u32 %v919, 4294901760
          %v1208 = vsub.f32 %v919, %v1207
          %1209 = vmatpush.msra.mxu0 %v1208
          %v1210 = vand.u32 %v918, 4294901760
          %v1211 = vsub.f32 %v918, %v1210
          %1212 = vmatpush.msra.mxu0 %v1211
          %v1213 = vand.u32 %v1117, 4294901760
          %v1214 = vsub.f32 %v1117, %v1213
          %1215 = vmatmul.f32.gmra.mxu0 %v1214
          %v1216 = vpop.f32.mrf.mxu0
          %v1217 = vadd.f32 %v1187, %v1216
          %1218 = vdwg.mxu0
          %1219 = vmatpush.msra.mxu0 0.0
          %1220 = vmatpush.msra.mxu0 0.0
          %1221 = vmatpush.msra.mxu0 0.0
          %1222 = vmatpush.msra.mxu0 0.0
          %1223 = vmatpush.msra.mxu0 0.0
          %1224 = vmatpush.msra.mxu0 0.0
          %1225 = vmatpush.msra.mxu0 0.0
          %1226 = vmatpush.msra.mxu0 0.0
          %1227 = vmatpush.msra.mxu0 0.0
          %1228 = vmatpush.msra.mxu0 0.0
          %1229 = vmatpush.msra.mxu0 0.0
          %1230 = vmatpush.msra.mxu0 0.0
          %v1231 = vand.u32 %v921, 4294901760
          %1232 = vmatpush.msra.mxu0 %v1231
          %v1233 = vand.u32 %v920, 4294901760
          %1234 = vmatpush.msra.mxu0 %v1233
          %v1235 = vand.u32 %v919, 4294901760
          %1236 = vmatpush.msra.mxu0 %v1235
          %v1237 = vand.u32 %v918, 4294901760
          %1238 = vmatpush.msra.mxu0 %v1237
          %v1239 = vand.u32 %v1117, 4294901760
          %v1240 = vsub.f32 %v1117, %v1239
          %v1241 = vand.u32 %v1240, 4294901760
          %1242 = vmatmul.f32.gmra.mxu0 %v1241
          %v1243 = vpop.f32.mrf.mxu0
          %v1244 = vadd.f32 %v1217, %v1243
          %1245 = vdwg.mxu0
          %1246 = vmatpush.msra.mxu0 0.0
          %1247 = vmatpush.msra.mxu0 0.0
          %1248 = vmatpush.msra.mxu0 0.0
          %1249 = vmatpush.msra.mxu0 0.0
          %1250 = vmatpush.msra.mxu0 0.0
          %1251 = vmatpush.msra.mxu0 0.0
          %1252 = vmatpush.msra.mxu0 0.0
          %1253 = vmatpush.msra.mxu0 0.0
          %1254 = vmatpush.msra.mxu0 0.0
          %1255 = vmatpush.msra.mxu0 0.0
          %1256 = vmatpush.msra.mxu0 0.0
          %1257 = vmatpush.msra.mxu0 0.0
          %v1258 = vand.u32 %v921, 4294901760
          %v1259 = vsub.f32 %v921, %v1258
          %v1260 = vand.u32 %v1259, 4294901760
          %1261 = vmatpush.msra.mxu0 %v1260
          %v1262 = vand.u32 %v920, 4294901760
          %v1263 = vsub.f32 %v920, %v1262
          %v1264 = vand.u32 %v1263, 4294901760
          %1265 = vmatpush.msra.mxu0 %v1264
          %v1266 = vand.u32 %v919, 4294901760
          %v1267 = vsub.f32 %v919, %v1266
          %v1268 = vand.u32 %v1267, 4294901760
          %1269 = vmatpush.msra.mxu0 %v1268
          %v1270 = vand.u32 %v918, 4294901760
          %v1271 = vsub.f32 %v918, %v1270
          %v1272 = vand.u32 %v1271, 4294901760
          %1273 = vmatpush.msra.mxu0 %v1272
          %v1274 = vand.u32 %v1117, 4294901760
          %1275 = vmatmul.f32.gmra.mxu0 %v1274
          %v1276 = vpop.f32.mrf.mxu0
          %v1277 = vadd.f32 %v1244, %v1276
          %1278 = vdwg.mxu0
          %1279 = vmatpush.msra.mxu0 0.0
          %1280 = vmatpush.msra.mxu0 0.0
          %1281 = vmatpush.msra.mxu0 0.0
          %1282 = vmatpush.msra.mxu0 0.0
          %1283 = vmatpush.msra.mxu0 0.0
          %1284 = vmatpush.msra.mxu0 0.0
          %1285 = vmatpush.msra.mxu0 0.0
          %1286 = vmatpush.msra.mxu0 0.0
          %1287 = vmatpush.msra.mxu0 0.0
          %1288 = vmatpush.msra.mxu0 0.0
          %1289 = vmatpush.msra.mxu0 0.0
          %1290 = vmatpush.msra.mxu0 0.0
          %v1291 = vand.u32 %v921, 4294901760
          %1292 = vmatpush.msra.mxu0 %v1291
          %v1293 = vand.u32 %v920, 4294901760
          %1294 = vmatpush.msra.mxu0 %v1293
          %v1295 = vand.u32 %v919, 4294901760
          %1296 = vmatpush.msra.mxu0 %v1295
          %v1297 = vand.u32 %v918, 4294901760
          %1298 = vmatpush.msra.mxu0 %v1297
          %v1299 = vand.u32 %v1117, 4294901760
          %1300 = vmatmul.f32.gmra.mxu0 %v1299
          %v1301 = vpop.f32.mrf.mxu0
          %v1302 = vadd.f32 %v1277, %v1301
          %1303 = vdwg.mxu0
          %v1304 = vld [vmem:[%s9] sm:$0x1]
          %v1306 = vperm.slane %v1304, 0
          %v1308 = vadd.f32 %v1302, %v1306
          %vm1309 = vcmask 123904
          %1310 = vst.msk [vmem:[#allocation2] sm:$0x3] %vm1309, %v1308
          %vm1311 = vcmask 1024
          %1312 = vst.msk [vmem:[#allocation3] sm:$0x3] %vm1311, -inf
          %1313 = vst.msk [vmem:[#allocation4] sm:$0x3] %vm1311, 0.0
          %1314 = vst [vmem:[%s17] sm:$0x3] 0.0
          %vm1316 = vcmask 254976
          %1317 = vst.msk [vmem:[%s17] sm:$0x3] %vm1316, %v1116
          %vm1318 = vcmask 517376
          %1319 = vst.msk [vmem:[%s17] sm:$0x3] %vm1318, %v911
          %v1320 = vld [vmem:[%s12] sm:$0x1]
          %v1322 = vperm.slane %v1320, 0
          %v1324 = vmul.f32 %v602, %v1322
          %v1325 = vsel %vm1316, %v1324, 0.0
          %1326 = vadd.xlane.f32.xlu0 %v1325
          %v1327 = vpop.xlane.xlu0 %1326
          %v1328 = vld [vmem:[%s13] sm:$0x1]
          %v1330 = vperm.slane %v1328, 0
          %1331 = vrot.lane.b32.xlu0 %v1330, 96
          %v1332 = vpop.permute.xlu0 %1331
          %v1334 = vmul.f32 %v917, %v1332
          %1336 = vrot.lane.b32.xlu0 %v1334, 32
          %v1337 = vpop.permute.xlu0 %1336
          %v1339 = vsel %vm1316, %v1337, 0.0
          %1340 = vadd.xlane.f32.xlu0 %v1339
          %v1341 = vpop.xlane.xlu0 %1340
          %v1342 = vadd.f32 %v1327, %v1341
          %v1343 = vld [vmem:[%s14] sm:$0x1]
          %v1345 = vperm.slane %v1343, 0
          %v1347 = vmul.f32 %v621, %v1345
          %v1348 = vsel %vm1316, %v1347, 0.0
          %1349 = vadd.xlane.f32.xlu0 %v1348
          %v1350 = vpop.xlane.xlu0 %1349
          %v1351 = vadd.f32 %v1342, %v1350
          %v1352 = vld [vmem:[#allocation7] sm:$0x1]
          %v1354 = vperm.slane %v1352, 0
          %v1356 = vadd.f32 %v1351, %v1354
          %v1357 = vand.u32 2147483647, %v1356
          %v1358 = vsub.f32 0.0, %v1357
          %v1359 = vmul.f32 %v1358, 1.442695
          %v1360 = vpow.pop %v1359
          %v1361 = vadd.f32 %v1360, 1.0
          %v1362 = vrcp.pop %v1361
          %v1363 = vmul.f32 %v1361, %v1362
          %v1364 = vsub.f32 1.0, %v1363
          %v1365 = vmul.f32 %v1362, %v1364
          %v1366 = vadd.f32 %v1362, %v1365
          %vm1367 = vweird.f32 %v1361
          %vm1368 = vweird.f32 %v1362
          %vm1369 = vmor %vm1367, %vm1368
          %v1370 = vsel %vm1369, %v1362, %v1366
          %v1371 = vand.u32 2147483647, %v1361
          %vm1372 = vcmp.eq.f32.partialorder %v1371, 8.507059e+37
          %v1373 = vand.u32 %v1361, 2147483648
          %v1374 = vor.u32 1.1754944e-38, %v1373
          %v1375 = vsel %vm1372, %v1374, %v1370
          %v1376 = vmul.f32 1.0, %v1375
          %vm1377 = vcmp.ge.f32.partialorder %v1356, 0.0
          %v1378 = vsub.f32 1.0, %v1376
          %v1379 = vsel %vm1377, %v1376, %v1378
          %1381 = vrot.lane.b32.xlu0 %v1379, 64
          %v1382 = vpop.permute.xlu0 %1381
          %vm1384 = vcmask 525824
          %1385 = vst.msk [vmem:[%s17] sm:$0x3] %vm1384, %v1382
        $region122: #{_decoder_forward_impl.1} parent=113 // pred_fallthru
          _
        %v1386 = vld [vmem:[#allocation2] sm:$0x3]
        %v1387 = vld [vmem:[%s541] sm:$0xff]
        %v1388 = vld [vmem:[%s541 + $0x8] sm:$0xff]
        %v1389 = vld [vmem:[%s593] sm:$0x1]
        %v1391 = vperm.slane %v1389, 0
        %vm1393 = vcmask 130048
        %v1395 = vsel %vm1393, %v1386, 0
        %1397 = vmatpush.msra.mxu0 0.0
        %1398 = vmatpush.msra.mxu0 0.0
        %1399 = vmatpush.msra.mxu0 0.0
        %1400 = vmatpush.msra.mxu0 0.0
        %1401 = vmatpush.msra.mxu0 0.0
        %1402 = vmatpush.msra.mxu0 0.0
        %1403 = vmatpush.msra.mxu0 0.0
        %1404 = vmatpush.msra.mxu0 0.0
        %1405 = vmatpush.msra.mxu0 0.0
        %1406 = vmatpush.msra.mxu0 0.0
        %1407 = vmatpush.msra.mxu0 0.0
        %1408 = vmatpush.msra.mxu0 0.0
        %1409 = vmatpush.msra.mxu0 0.0
        %1410 = vmatpush.msra.mxu0 0.0
        %v1411 = vand.u32 %v1388, 4294901760
        %1412 = vmatpush.msra.mxu0 %v1411
        %v1413 = vand.u32 %v1387, 4294901760
        %1414 = vmatpush.msra.mxu0 %v1413
        %v1415 = vand.u32 %v1395, 4294901760
        %v1416 = vsub.f32 %v1395, %v1415
        %v1417 = vand.u32 %v1416, 4294901760
        %v1418 = vsub.f32 %v1416, %v1417
        %v1419 = vand.u32 %v1418, 4294901760
        %1420 = vmatmul.f32.gmra.mxu0 %v1419
        %v1421 = vpop.f32.mrf.mxu0
        %v1422 = vadd.f32 %v1391, %v1421
        %1423 = vdwg.mxu0
        %1424 = vmatpush.msra.mxu0 0.0
        %1425 = vmatpush.msra.mxu0 0.0
        %1426 = vmatpush.msra.mxu0 0.0
        %1427 = vmatpush.msra.mxu0 0.0
        %1428 = vmatpush.msra.mxu0 0.0
        %1429 = vmatpush.msra.mxu0 0.0
        %1430 = vmatpush.msra.mxu0 0.0
        %1431 = vmatpush.msra.mxu0 0.0
        %1432 = vmatpush.msra.mxu0 0.0
        %1433 = vmatpush.msra.mxu0 0.0
        %1434 = vmatpush.msra.mxu0 0.0
        %1435 = vmatpush.msra.mxu0 0.0
        %1436 = vmatpush.msra.mxu0 0.0
        %1437 = vmatpush.msra.mxu0 0.0
        %v1438 = vand.u32 %v1388, 4294901760
        %v1439 = vsub.f32 %v1388, %v1438
        %v1440 = vand.u32 %v1439, 4294901760
        %v1441 = vsub.f32 %v1439, %v1440
        %v1442 = vand.u32 %v1441, 4294901760
        %1443 = vmatpush.msra.mxu0 %v1442
        %v1444 = vand.u32 %v1387, 4294901760
        %v1445 = vsub.f32 %v1387, %v1444
        %v1446 = vand.u32 %v1445, 4294901760
        %v1447 = vsub.f32 %v1445, %v1446
        %v1448 = vand.u32 %v1447, 4294901760
        %1449 = vmatpush.msra.mxu0 %v1448
        %v1450 = vand.u32 %v1395, 4294901760
        %1451 = vmatmul.f32.gmra.mxu0 %v1450
        %v1452 = vpop.f32.mrf.mxu0
        %v1453 = vadd.f32 %v1422, %v1452
        %1454 = vdwg.mxu0
        %1455 = vmatpush.msra.mxu0 0.0
        %1456 = vmatpush.msra.mxu0 0.0
        %1457 = vmatpush.msra.mxu0 0.0
        %1458 = vmatpush.msra.mxu0 0.0
        %1459 = vmatpush.msra.mxu0 0.0
        %1460 = vmatpush.msra.mxu0 0.0
        %1461 = vmatpush.msra.mxu0 0.0
        %1462 = vmatpush.msra.mxu0 0.0
        %1463 = vmatpush.msra.mxu0 0.0
        %1464 = vmatpush.msra.mxu0 0.0
        %1465 = vmatpush.msra.mxu0 0.0
        %1466 = vmatpush.msra.mxu0 0.0
        %1467 = vmatpush.msra.mxu0 0.0
        %1468 = vmatpush.msra.mxu0 0.0
        %v1469 = vand.u32 %v1388, 4294901760
        %v1470 = vsub.f32 %v1388, %v1469
        %1471 = vmatpush.msra.mxu0 %v1470
        %v1472 = vand.u32 %v1387, 4294901760
        %v1473 = vsub.f32 %v1387, %v1472
        %1474 = vmatpush.msra.mxu0 %v1473
        %v1475 = vand.u32 %v1395, 4294901760
        %v1476 = vsub.f32 %v1395, %v1475
        %1477 = vmatmul.f32.gmra.mxu0 %v1476
        %v1478 = vpop.f32.mrf.mxu0
        %v1479 = vadd.f32 %v1453, %v1478
        %1480 = vdwg.mxu0
        %1481 = vmatpush.msra.mxu0 0.0
        %1482 = vmatpush.msra.mxu0 0.0
        %1483 = vmatpush.msra.mxu0 0.0
        %1484 = vmatpush.msra.mxu0 0.0
        %1485 = vmatpush.msra.mxu0 0.0
        %1486 = vmatpush.msra.mxu0 0.0
        %1487 = vmatpush.msra.mxu0 0.0
        %1488 = vmatpush.msra.mxu0 0.0
        %1489 = vmatpush.msra.mxu0 0.0
        %1490 = vmatpush.msra.mxu0 0.0
        %1491 = vmatpush.msra.mxu0 0.0
        %1492 = vmatpush.msra.mxu0 0.0
        %1493 = vmatpush.msra.mxu0 0.0
        %1494 = vmatpush.msra.mxu0 0.0
        %v1495 = vand.u32 %v1388, 4294901760
        %1496 = vmatpush.msra.mxu0 %v1495
        %v1497 = vand.u32 %v1387, 4294901760
        %1498 = vmatpush.msra.mxu0 %v1497
        %v1499 = vand.u32 %v1395, 4294901760
        %v1500 = vsub.f32 %v1395, %v1499
        %v1501 = vand.u32 %v1500, 4294901760
        %1502 = vmatmul.f32.gmra.mxu0 %v1501
        %v1503 = vpop.f32.mrf.mxu0
        %v1504 = vadd.f32 %v1479, %v1503
        %1505 = vdwg.mxu0
        %1506 = vmatpush.msra.mxu0 0.0
        %1507 = vmatpush.msra.mxu0 0.0
        %1508 = vmatpush.msra.mxu0 0.0
        %1509 = vmatpush.msra.mxu0 0.0
        %1510 = vmatpush.msra.mxu0 0.0
        %1511 = vmatpush.msra.mxu0 0.0
        %1512 = vmatpush.msra.mxu0 0.0
        %1513 = vmatpush.msra.mxu0 0.0
        %1514 = vmatpush.msra.mxu0 0.0
        %1515 = vmatpush.msra.mxu0 0.0
        %1516 = vmatpush.msra.mxu0 0.0
        %1517 = vmatpush.msra.mxu0 0.0
        %1518 = vmatpush.msra.mxu0 0.0
        %1519 = vmatpush.msra.mxu0 0.0
        %v1520 = vand.u32 %v1388, 4294901760
        %v1521 = vsub.f32 %v1388, %v1520
        %v1522 = vand.u32 %v1521, 4294901760
        %1523 = vmatpush.msra.mxu0 %v1522
        %v1524 = vand.u32 %v1387, 4294901760
        %v1525 = vsub.f32 %v1387, %v1524
        %v1526 = vand.u32 %v1525, 4294901760
        %1527 = vmatpush.msra.mxu0 %v1526
        %v1528 = vand.u32 %v1395, 4294901760
        %1529 = vmatmul.f32.gmra.mxu0 %v1528
        %v1530 = vpop.f32.mrf.mxu0
        %v1531 = vadd.f32 %v1504, %v1530
        %1532 = vdwg.mxu0
        %1533 = vmatpush.msra.mxu0 0.0
        %1534 = vmatpush.msra.mxu0 0.0
        %1535 = vmatpush.msra.mxu0 0.0
        %1536 = vmatpush.msra.mxu0 0.0
        %1537 = vmatpush.msra.mxu0 0.0
        %1538 = vmatpush.msra.mxu0 0.0
        %1539 = vmatpush.msra.mxu0 0.0
        %1540 = vmatpush.msra.mxu0 0.0
        %1541 = vmatpush.msra.mxu0 0.0
        %1542 = vmatpush.msra.mxu0 0.0
        %1543 = vmatpush.msra.mxu0 0.0
        %1544 = vmatpush.msra.mxu0 0.0
        %1545 = vmatpush.msra.mxu0 0.0
        %1546 = vmatpush.msra.mxu0 0.0
        %v1547 = vand.u32 %v1388, 4294901760
        %1548 = vmatpush.msra.mxu0 %v1547
        %v1549 = vand.u32 %v1387, 4294901760
        %1550 = vmatpush.msra.mxu0 %v1549
        %v1551 = vand.u32 %v1395, 4294901760
        %1552 = vmatmul.f32.gmra.mxu0 %v1551
        %v1553 = vpop.f32.mrf.mxu0
        %v1554 = vadd.f32 %v1531, %v1553
        %1555 = vdwg.mxu0
        // Predicated region
        $region123: #{_decoder_forward_impl.1} parent=113 // pred_check
          %p1556 = pneg %p594
        $region124: #{_decoder_forward_impl.1} parent=113 // pred_check_branch
          %1558 = sbr.rel (%p1556) target = $region126
        $region125: #{_decoder_forward_impl.1} parent=113 // pred_region
          %v1559 = vld [vmem:[#allocation3] sm:$0x3]
          %vm1560 = vcmask 1041408
          %v1561 = vsel %vm1560, %v1554, -inf
          %1562 = vmax.xlane.f32.xlu0 %v1561
          %v1563 = vpop.xlane.xlu0 %1562
          %v1564 = vmax.f32 %v1559, %v1563
          %1566 = vset.pattern.permute.xlu0 0
          %1567 = vperm.xlu0 %1566, %v1564
          %v1568 = vpop.permute.xlu0 %1567
          %v1570 = vsub.f32 %v1554, %v1568
          %v1571 = vmul.f32 %v1570, 1.442695
          %v1572 = vpow.pop %v1571
          %v1573 = vld [vmem:[#allocation4] sm:$0x3]
          %v1574 = vsub.f32 %v1559, %v1564
          %v1575 = vmul.f32 %v1574, 1.442695
          %v1576 = vpow.pop %v1575
          %v1577 = vmul.f32 %v1573, %v1576
          %v1578 = vsel %vm1560, %v1572, 0.0
          %1579 = vadd.xlane.f32.xlu0 %v1578
          %v1580 = vpop.xlane.xlu0 %1579
          %v1581 = vadd.f32 %v1577, %v1580
          %vm1582 = vcmask 1024
          %1583 = vst.msk [vmem:[#allocation4] sm:$0x3] %vm1582, %v1581
          %1584 = vst.msk [vmem:[#allocation3] sm:$0x3] %vm1582, %v1564
          %1585 = vst [vmem:[%s588] sm:$0x3] %v1572
        $region126: #{_decoder_forward_impl.1} parent=113 // pred_fallthru
          _
        %p1586 = scmp.eq.s32.totalorder %s46, 1
        %p1587 = pnand %p1586, %p595
        %p1588 = pneg %p1587
        // Predicated region
        $region127: #{_decoder_forward_impl.1} parent=113 // pred_check
          _
        $region128: #{_decoder_forward_impl.1} parent=113 // pred_check_branch
          %1590 = sbr.rel (%p1587) target = $region130
        $region129: #{_decoder_forward_impl.1} parent=113 // pred_region
          %v1591 = vld [vmem:[#allocation4] sm:$0x3]
          %v1592 = vrcp.pop %v1591
          %vm1593 = vcmask 1024
          %1594 = vst.msk [vmem:[#allocation4] sm:$0x3] %vm1593, %v1592
        $region130: #{_decoder_forward_impl.1} parent=113 // pred_fallthru
          _
        // Predicated region
        $region131: #{_decoder_forward_impl.1} parent=113 // pred_check
          %p1595 = pneg %p1586
        $region132: #{_decoder_forward_impl.1} parent=113 // pred_check_branch
          %1597 = sbr.rel (%p1595) target = $region134
        $region133: #{_decoder_forward_impl.1} parent=113 // pred_region
          %v1598 = vld [vmem:[#allocation3] sm:$0x3]
          %1600 = vset.pattern.permute.xlu0 0
          %1601 = vperm.xlu0 %1600, %v1598
          %v1602 = vpop.permute.xlu0 %1601
          %v1604 = vsub.f32 %v1554, %v1602
          %v1605 = vmul.f32 %v1604, 1.442695
          %v1606 = vpow.pop %v1605
          %v1607 = vld [vmem:[#allocation4] sm:$0x3]
          %1609 = vset.pattern.permute.xlu0 0
          %1610 = vperm.xlu0 %1609, %v1607
          %v1611 = vpop.permute.xlu0 %1610
          %v1613 = vmul.f32 %v1606, %v1611
          %1614 = vst [vmem:[%s588] sm:$0x3] %v1613
        $region134: #{_decoder_forward_impl.1} parent=113 // pred_fallthru
          _
        %s1615 = sand.u32 %s387, 1
        %s1616 = scalar_lea.sflag [#allocation10], %s1615
        %s1617 = sand.u32 %s387, 1
        %s1618 = smul.addr %s1617, 2
        %s1619 = scalar_lea.vmem [#allocation9], %s1618
        // Predicated region
        $region135: #{_decoder_forward_impl.1} parent=113 // pred_check
          %p1620 = pneg %p397
        $region136: #{_decoder_forward_impl.1} parent=113 // pred_check_branch
          %1622 = sbr.rel (%p1620) target = $region138
        $region137: #{_decoder_forward_impl.1} parent=113 // pred_region
          %1624 = vsyncadd %s1616, 0
          %s1625 = smul.addr %s47, 2
          %s1626 = scalar_lea.hbm %s16, %s1625
          %s1628 = sshll.u32 %s1619, 4
          %s1629 = int_to_ptr.vmem [resolvable:$true] %s1628
          %s1630 = sshll.u32 %s1626, 4
          %s1631 = int_to_ptr.hbm [resolvable:$true] %s1630
          %1633 = dma.vmem_to_hbm [thread:$0]  %s1629, 32, %s1631, %s1616
        $region138: #{_decoder_forward_impl.1} parent=113 // pred_fallthru
          _
        // Predicated region
        $region139: #{_decoder_forward_impl.1} parent=113 // pred_check
          %p1634 = pneg %p418
        $region140: #{_decoder_forward_impl.1} parent=113 // pred_check_branch
          %1636 = sbr.rel (%p1634) target = $region142
        $region141: #{_decoder_forward_impl.1} parent=113 // pred_region
          _
        $region142: #{_decoder_forward_impl.1} parent=113 // pred_fallthru
          _
        // Predicated region
        $region143: #{_decoder_forward_impl.1} parent=113 // pred_check
          %p1637 = pneg %p418
        $region144: #{_decoder_forward_impl.1} parent=113 // pred_check_branch
          %1639 = sbr.rel (%p1637) target = $region146
        $region145: #{_decoder_forward_impl.1} parent=113 // pred_region
          _
        $region146: #{_decoder_forward_impl.1} parent=113 // pred_fallthru
          _
      $region114: #{_decoder_forward_impl.1} parent=5 // pred_fallthru
        _
      %p1640 = scmp.le.s32.totalorder 2, %s37
      // Predicated region
      $region147: #{_decoder_forward_impl.1} parent=5 // pred_check
        %p1641 = pneg %p1640
      $region148: #{_decoder_forward_impl.1} parent=5 // pred_check_branch
        %1643 = sbr.rel (%p1641) target = $region150
      $region149: #{_decoder_forward_impl.1} parent=5 // pred_region
        %s1644 = ssub.s32 %s37, 2
        // Predicated region
        $region151: #{_decoder_forward_impl.1} parent=149 // pred_check
          %p1645 = pneg %p403
        $region152: #{_decoder_forward_impl.1} parent=149 // pred_check_branch
          %1647 = sbr.rel (%p1645) target = $region154
        $region153: #{_decoder_forward_impl.1} parent=149 // pred_region
          %s1648 = sand.u32 %s388, 1
          %s1649 = scalar_lea.sflag [#allocation10], %s1648
          %s1650 = sand.u32 %s388, 1
          %s1651 = smul.addr %s1650, 2
          %s1652 = scalar_lea.vmem [#allocation9], %s1651
          %1654 = dma.done %s1649, 32
        $region154: #{_decoder_forward_impl.1} parent=149 // pred_fallthru
          _
      $region150: #{_decoder_forward_impl.1} parent=5 // pred_fallthru
        _
    $region6: #{_decoder_forward_impl.1} parent=1 // loop_footer
      %s41 = sadd.s32 1, %s37
    $region7: #{_decoder_forward_impl.1} parent=1 // loop_footer_branch
      %36 = sbr.rel target = $region3
    $region8: #{_decoder_forward_impl.1} parent=1 // loop_exit
      _
    %1655 = vsyncpa [#allocation10], 1
    %s1656 = scalar_lea.sflag [#allocation10], 1
    %1657 = vsyncpa %s1656, 1

</llo_original>
